<compile_context>
chip_gen: v5e
topology: v5e:2x2
jax: 0.10.0
libtpu: 0.0.40
codegen_flags: <defaults>
</compile_context>

<pallas_src>
import functools
import math

import jax
import jax.numpy as jnp
from jax.experimental import pallas as pl
from jax.experimental.pallas import tpu as pltpu


def _round_up(x, m):
    return (x + m - 1) // m * m


# --------------------------- layer hyper-parameters --------------------------
# conv2d1: Conv2d(14, 60, 41, stride=5, padding=3)                      (exact)
C_IN, C1_OUT, K1, S1, P1 = 14, 60, 41, 5, 3
# TODO(synk): original ConvTranspose2d(24, 81, 10, stride=1, padding=4,
# dilation=6) is ill-typed against the forward graph (receives 60 channels and
# its output is added to a 14-channel tensor); channels adapted 24->60 (in) and
# 81->14 (out).  Kernel/stride/pad/dilation kept exactly.
C2_IN, C2_OUT, K2, S2, P2, D2 = 60, 14, 10, 1, 4, 6

# ------------------------------- tile choices --------------------------------
TN1, TK1 = 64, 2048          # conv1 matmul:  (16 x 23534) @ (23534 x 60)
TN2, TK2 = 1408, 64          # convT2 matmul: (16 x 60)    @ (60 x 1400)

K1_FLAT = C_IN * K1 * K1                      # 23534
K1_PAD = _round_up(K1_FLAT, TK1)              # 24576
N1_PAD = _round_up(C1_OUT, TN1)               # 64
N2_FLAT = C2_OUT * K2 * K2                    # 1400
K2_PAD = _round_up(C2_IN, TK2)                # 64
N2_PAD = _round_up(N2_FLAT, TN2)              # 1408


# ------------------ Pallas tiled matmul + bias (+ optional ReLU) -------------
def _matmul_bias_kernel(a_ref, b_ref, bias_ref, o_ref, acc_ref, *, apply_relu):
    @pl.when(pl.program_id(2) == 0)
    def _():
        acc_ref[...] = jnp.zeros_like(acc_ref)

    acc_ref[...] += jnp.dot(a_ref[...], b_ref[...],
                            preferred_element_type=jnp.float32)

    @pl.when(pl.program_id(2) == pl.num_programs(2) - 1)
    def _():
        out = acc_ref[...] + bias_ref[...]
        if apply_relu:
            out = jnp.maximum(out, 0.0)
        o_ref[...] = out.astype(o_ref.dtype)


def matmul_bias(a, b, bias, *, apply_relu=False, tm, tn, tk):
    """a:(M,K) @ b:(Kp,Np) + bias:(N,) -> (M,N) on the MXU.

    `b` may be pre-padded (Kp >= K, Np >= N, both tile-aligned) so the big
    weight matrices are padded once at prepare time, not per forward call.
    """
    M, K = a.shape
    Kp, Np = b.shape
    N = bias.shape[0]
    assert Kp >= K and Kp % tk == 0 and Np >= N and Np % tn == 0
    Mp = _round_up(M, tm)
    if (Mp, Kp) != (M, K):
        a = jnp.pad(a, ((0, Mp - M), (0, Kp - K)))
    bias_p = bias if Np == N else jnp.pad(bias, (0, Np - N))
    bias_p = bias_p.reshape(1, Np)

    cost = pl.CostEstimate(
        flops=2 * M * K * N,
        transcendentals=0,
        bytes_accessed=4 * (M * K + K * N + M * N + N),
    )

    out = pl.pallas_call(
        functools.partial(_matmul_bias_kernel, apply_relu=apply_relu),
        out_shape=jax.ShapeDtypeStruct((Mp, Np), jnp.float32),
        grid_spec=pltpu.PrefetchScalarGridSpec(
            num_scalar_prefetch=0,
            grid=(Mp // tm, Np // tn, Kp // tk),
            in_specs=[
                pl.BlockSpec((tm, tk), lambda i, j, k: (i, k)),
                pl.BlockSpec((tk, tn), lambda i, j, k: (k, j)),
                pl.BlockSpec((1, tn), lambda i, j, k: (0, j)),
            ],
            out_specs=pl.BlockSpec((tm, tn), lambda i, j, k: (i, j)),
            scratch_shapes=[pltpu.VMEM((tm, tn), jnp.float32)],
        ),
        compiler_params=pltpu.CompilerParams(
            dimension_semantics=("parallel", "parallel", "arbitrary")),
        cost_estimate=cost,
    )(a, b, bias_p)
    return out[:M, :N]


# ------------------------------ im2col (glue) --------------------------------
def im2col(x, kh, kw, stride, padding, dilation):
    """x: (N, C, H, W) -> patches (N*Ho*Wo, C*kh*kw), plus (Ho, Wo)."""
    N, C, H, W = x.shape
    xp = jnp.pad(x, ((0, 0), (0, 0), (padding, padding), (padding, padding)))
    Ho = (H + 2 * padding - dilation * (kh - 1) - 1) // stride + 1
    Wo = (W + 2 * padding - dilation * (kw - 1) - 1) // stride + 1
    r = (jnp.arange(Ho) * stride)[:, None] + (jnp.arange(kh) * dilation)[None, :]
    c = (jnp.arange(Wo) * stride)[:, None] + (jnp.arange(kw) * dilation)[None, :]
    patches = xp[:, :, r[:, None, :, None], c[None, :, None, :]]     # (N,C,Ho,Wo,kh,kw)
    patches = patches.transpose(0, 2, 3, 1, 4, 5).reshape(N * Ho * Wo, C * kh * kw)
    return patches, Ho, Wo


# ------------------------- fused elementwise tail kernel ---------------------
def _fused_tail_kernel(x_ref, s_ref, b_ref, o_ref):
    # y4 = tanh(x7 + y2)   where y2 = (convT2 output without bias) + bias[c]
    o_ref[...] = jnp.tanh(x_ref[...] + s_ref[...] + b_ref[...])


def fused_tail(x2d, s2d, b_col):
    """x2d, s2d: (C, H*W) lane-dense; b_col: (C, 1) per-channel bias.
    Only y4 is produced (the original y5/y6 are dead code)."""
    return pl.pallas_call(
        _fused_tail_kernel,
        out_shape=jax.ShapeDtypeStruct(x2d.shape, x2d.dtype),
    )(x2d, s2d, b_col)


# --------------------------------- parameters --------------------------------
def init_params(key):
    ks = jax.random.split(key, 8)

    def u(k, shape, fan_in):
        bound = 1.0 / math.sqrt(fan_in)
        return jax.random.uniform(k, shape, jnp.float32, -bound, bound)

    p = {}
    # conv2d1: Conv2d(14, 60, 41, stride=5, padding=3)   (exact)
    p["w1"] = u(ks[0], (C1_OUT, C_IN, K1, K1), C_IN * K1 * K1)
    p["b1"] = u(ks[1], (C1_OUT,), C_IN * K1 * K1)
    # conv2d2 (ConvTranspose2d) weight layout: (Cin, Cout, kh, kw)
    p["w2"] = u(ks[2], (C2_IN, C2_OUT, K2, K2), C2_OUT * K2 * K2)
    p["b2"] = u(ks[3], (C2_OUT,), C2_OUT * K2 * K2)
    # TODO(synk): conv2d3 / conv2d4 parameters kept only for __init__ parity
    # (channels adapted 37->41 and 13->14); they feed y3 which is dead code in
    # the original forward and is not executed here.
    p["w3"] = u(ks[4], (25, 41, 23, 23), 41 * 23 * 23)
    p["b3"] = u(ks[5], (25,), 41 * 23 * 23)
    p["w4"] = u(ks[6], (41, C_IN, 7, 7), C_IN * 7 * 7)
    p["b4"] = u(ks[7], (41,), C_IN * 7 * 7)
    return p


def prepare_params(p):
    """One-time reshape + pad of the conv weights into matmul-ready layout
    (so no per-call jnp.pad copies happen inside the jitted forward)."""
    w1 = p["w1"].reshape(C1_OUT, K1_FLAT).T                        # (23534, 60)
    w1 = jnp.pad(w1, ((0, K1_PAD - K1_FLAT), (0, N1_PAD - C1_OUT)))
    w2 = p["w2"].reshape(C2_IN, N2_FLAT)                           # (60, 1400)
    w2 = jnp.pad(w2, ((0, K2_PAD - C2_IN), (0, N2_PAD - N2_FLAT)))
    return {"w1mat": w1, "b1": p["b1"], "w2mat": w2, "b2": p["b2"]}


# ---------------------------------- forward ----------------------------------
@jax.jit
def model_forward(prep, x):
    N, C, H, W = x.shape
    assert N == 1 and C == C_IN

    # ---- y1 = relu(conv2d1(x7)):  im2col + Pallas MXU matmul ---------------
    patches, Ho, Wo = im2col(x, K1, K1, stride=S1, padding=P1, dilation=1)
    m = patches.shape[0]                                   # N*Ho*Wo (= 16)
    y1_sc = matmul_bias(patches, prep["w1mat"], prep["b1"], apply_relu=True,
                        tm=_round_up(m, 8), tn=TN1, tk=TK1)  # (16, 60): rows=(ih,iw), cols=c

    # ---- y2 = conv2d2(y1)  (ConvTranspose2d) -------------------------------
    # stride=1 and dilation(6) >= y1's spatial extent (4) => every output
    # pixel receives at most one kernel tap per spatial dim.  So the layer is
    # a tiny dense matmul T[(ih,iw),(co,kh,kw)] followed by a NON-overlapping
    # scatter (pure reshape/pad/crop) -- no zero-filled im2col needed.
    assert S2 == 1 and Ho <= D2 and Wo <= D2
    T = matmul_bias(y1_sc, prep["w2mat"],
                    jnp.zeros((N2_FLAT,), jnp.float32),     # bias fused into the tail
                    tm=_round_up(m, 8), tn=TN2, tk=TK2)     # (16, 1400)
    T5 = T.reshape(Ho, Wo, C2_OUT, K2, K2).transpose(2, 3, 0, 4, 1)  # (co,kh,ih,kw,iw)
    Z = jnp.pad(T5, ((0, 0), (0, 0), (0, D2 - Ho), (0, 0), (0, D2 - Wo)))
    Z = Z.reshape(C2_OUT, K2 * D2, K2 * D2)   # uncropped position = kh*dil + ih (unique)
    Htr = (Ho - 1) * S2 - 2 * P2 + D2 * (K2 - 1) + 1
    Wtr = (Wo - 1) * S2 - 2 * P2 + D2 * (K2 - 1) + 1
    assert (Htr, Wtr) == (H, W)               # y2 must be addable to x7
    scat = Z[:, P2:P2 + H, P2:P2 + W]                        # (14, 50, 50), bias not yet added

    # ---- y4 = tanh(x7 + y2)  (ConvTranspose bias fused into the tail) ------
    # TODO(synk): y3 = conv2d3(relu(conv2d4(x7))), y5 = 0.1722*y2 and
    # y6 = -x7 + y4 are dead code in the original forward (only y4 is
    # returned) and are intentionally not executed.
    y4 = fused_tail(x.reshape(C_IN, H * W),
                    scat.reshape(C2_OUT, H * W),
                    prep["b2"].reshape(C2_OUT, 1))
    return y4.reshape(N, C_IN, H, W)


if __name__ == "__main__":
    key = jax.random.PRNGKey(0)
    kx, kp = jax.random.split(key)
    # TODO(synk): spatial size changed (62, 89) -> (50, 50): with the original
    # conv1 / convT2 hyper-parameters this is the size at which y2 matches x7
    # spatially (the original forward is shape-inconsistent and cannot run).
    x7 = jax.random.normal(kx, (1, C_IN, 50, 50), jnp.float32)
    params = init_params(kp)
    prep = prepare_params(params)

    y4 = model_forward(prep, x7)
    y4 = jax.block_until_ready(y4)
    assert y4.shape == (1, C_IN, 50, 50) and y4.dtype == jnp.float32
    assert bool(jnp.all(jnp.isfinite(y4)))
    print("KERNEL_OK")
</pallas_src>

<mosaic_0001>
module attributes {stable_mosaic.version = 11 : i64} {
  func.func @_matmul_bias_kernel(%arg0: i32, %arg1: i32, %arg2: i32, %arg3: memref<16x2048xf32, #tpu.memory_space<vmem>>, %arg4: memref<2048x64xf32, #tpu.memory_space<vmem>>, %arg5: memref<1x64xf32, #tpu.memory_space<vmem>>, %arg6: memref<16x64xf32, #tpu.memory_space<vmem>>, %arg7: memref<16x64xf32, #tpu.memory_space<vmem>>) attributes {dimension_semantics = [#tpu.dimension_semantics<parallel>, #tpu.dimension_semantics<parallel>, #tpu.dimension_semantics<arbitrary>], iteration_bounds = array<i64: 1, 1, 12>, scalar_prefetch = 0 : i64, scratch_operands = 1 : i64, tpu.core_type = #tpu.core_type<tc>, window_params = [{transform_indices = @transform_0, window_bounds = array<i64: 16, 2048>}, {transform_indices = @transform_1, window_bounds = array<i64: 2048, 64>}, {transform_indices = @transform_2, window_bounds = array<i64: 1, 64>}, {transform_indices = @transform_3, window_bounds = array<i64: 16, 64>}]} {
    %c0_i32 = arith.constant 0 : i32
    %0 = arith.cmpi eq, %arg2, %c0_i32 : i32
    %1 = arith.extui %0 : i1 to i32
    %c0_i32_0 = arith.constant 0 : i32
    %2 = arith.cmpi ne, %1, %c0_i32_0 : i32
    scf.if %2 {
      %cst_9 = arith.constant 0.000000e+00 : f32
      %12 = vector.broadcast %cst_9 : f32 to vector<16x64xf32>
      %c0_10 = arith.constant 0 : index
      %c0_11 = arith.constant 0 : index
      %13 = vector.load %arg7[%c0_10, %c0_11] : memref<16x64xf32, #tpu.memory_space<vmem>>, vector<16x64xf32>
      tpu.vector_store %arg7[%c0_10, %c0_11], %12 {strides = array<i32>} : memref<16x64xf32, #tpu.memory_space<vmem>>, vector<16x64xf32>,
    } else {
    }
    %c0 = arith.constant 0 : index
    %c0_1 = arith.constant 0 : index
    %3 = vector.load %arg7[%c0, %c0_1] : memref<16x64xf32, #tpu.memory_space<vmem>>, vector<16x64xf32>
    %c0_2 = arith.constant 0 : index
    %c0_3 = arith.constant 0 : index
    %4 = vector.load %arg3[%c0_2, %c0_3] : memref<16x2048xf32, #tpu.memory_space<vmem>>, vector<16x2048xf32>
    %c0_4 = arith.constant 0 : index
    %c0_5 = arith.constant 0 : index
    %5 = vector.load %arg4[%c0_4, %c0_5] : memref<2048x64xf32, #tpu.memory_space<vmem>>, vector<2048x64xf32>
    %cst = arith.constant dense<0.000000e+00> : vector<16x64xf32>
    %6 = tpu.matmul %4, %5, %cst {dimension_numbers = #tpu.dot_dimension_numbers<[1], [0], [0], [1], [0, 0, 1, 1], [], []>} : vector<16x2048xf32>, vector<2048x64xf32>, vector<16x64xf32> -> vector<16x64xf32>
    %7 = arith.addf %3, %6 : vector<16x64xf32>
    %c0_6 = arith.constant 0 : index
    %c0_7 = arith.constant 0 : index
    %8 = vector.load %arg7[%c0_6, %c0_7] : memref<16x64xf32, #tpu.memory_space<vmem>>, vector<16x64xf32>
    tpu.vector_store %arg7[%c0_6, %c0_7], %7 {strides = array<i32>} : memref<16x64xf32, #tpu.memory_space<vmem>>, vector<16x64xf32>,
    %c11_i32 = arith.constant 11 : i32
    %9 = arith.cmpi eq, %arg2, %c11_i32 : i32
    %10 = arith.extui %9 : i1 to i32
    %c0_i32_8 = arith.constant 0 : i32
    %11 = arith.cmpi ne, %10, %c0_i32_8 : i32
    scf.if %11 {
      %c0_9 = arith.constant 0 : index
      %c0_10 = arith.constant 0 : index
      %12 = vector.load %arg7[%c0_9, %c0_10] : memref<16x64xf32, #tpu.memory_space<vmem>>, vector<16x64xf32>
      %c0_11 = arith.constant 0 : index
      %c0_12 = arith.constant 0 : index
      %13 = vector.load %arg5[%c0_11, %c0_12] : memref<1x64xf32, #tpu.memory_space<vmem>>, vector<1x64xf32>
      %14 = vector.broadcast %13 : vector<1x64xf32> to vector<16x64xf32>
      %15 = arith.addf %12, %14 : vector<16x64xf32>
      %cst_13 = arith.constant 0.000000e+00 : f32
      %16 = vector.broadcast %cst_13 : f32 to vector<16x64xf32>
      %17 = arith.maximumf %15, %16 : vector<16x64xf32>
      %c0_14 = arith.constant 0 : index
      %c0_15 = arith.constant 0 : index
      %18 = vector.load %arg6[%c0_14, %c0_15] : memref<16x64xf32, #tpu.memory_space<vmem>>, vector<16x64xf32>
      tpu.vector_store %arg6[%c0_14, %c0_15], %17 {strides = array<i32>} : memref<16x64xf32, #tpu.memory_space<vmem>>, vector<16x64xf32>,
    } else {
    }
    return
  }
  func.func @transform_0(%arg0: i32, %arg1: i32, %arg2: i32) -> (i32, i32) {
    %c0_i32 = arith.constant 0 : i32
    return %arg0, %arg2 : i32, i32
  }
  func.func @transform_1(%arg0: i32, %arg1: i32, %arg2: i32) -> (i32, i32) {
    %c0_i32 = arith.constant 0 : i32
    return %arg2, %arg1 : i32, i32
  }
  func.func @transform_2(%arg0: i32, %arg1: i32, %arg2: i32) -> (i32, i32) {
    %c0_i32 = arith.constant 0 : i32
    %c0_i32_0 = arith.constant 0 : i32
    return %c0_i32, %arg1 : i32, i32
  }
  func.func @transform_3(%arg0: i32, %arg1: i32, %arg2: i32) -> (i32, i32) {
    %c0_i32 = arith.constant 0 : i32
    return %arg0, %arg1 : i32, i32
  }
}

module attributes {stable_mosaic.version = 11 : i64} {
  func.func @_matmul_bias_kernel(%arg0: i32, %arg1: i32, %arg2: i32, %arg3: memref<16x64xf32, #tpu.memory_space<vmem>>, %arg4: memref<64x1408xf32, #tpu.memory_space<vmem>>, %arg5: memref<1x1408xf32, #tpu.memory_space<vmem>>, %arg6: memref<16x1408xf32, #tpu.memory_space<vmem>>, %arg7: memref<16x1408xf32, #tpu.memory_space<vmem>>) attributes {dimension_semantics = [#tpu.dimension_semantics<parallel>, #tpu.dimension_semantics<parallel>, #tpu.dimension_semantics<arbitrary>], iteration_bounds = array<i64: 1, 1, 1>, scalar_prefetch = 0 : i64, scratch_operands = 1 : i64, tpu.core_type = #tpu.core_type<tc>, window_params = [{transform_indices = @transform_0, window_bounds = array<i64: 16, 64>}, {transform_indices = @transform_1, window_bounds = array<i64: 64, 1408>}, {transform_indices = @transform_2, window_bounds = array<i64: 1, 1408>}, {transform_indices = @transform_3, window_bounds = array<i64: 16, 1408>}]} {
    %c0_i32 = arith.constant 0 : i32
    %0 = arith.cmpi eq, %arg2, %c0_i32 : i32
    %1 = arith.extui %0 : i1 to i32
    %c0_i32_0 = arith.constant 0 : i32
    %2 = arith.cmpi ne, %1, %c0_i32_0 : i32
    scf.if %2 {
      %cst_10 = arith.constant 0.000000e+00 : f32
      %12 = vector.broadcast %cst_10 : f32 to vector<16x1408xf32>
      %c0_11 = arith.constant 0 : index
      %c0_12 = arith.constant 0 : index
      %13 = vector.load %arg7[%c0_11, %c0_12] : memref<16x1408xf32, #tpu.memory_space<vmem>>, vector<16x1408xf32>
      tpu.vector_store %arg7[%c0_11, %c0_12], %12 {strides = array<i32>} : memref<16x1408xf32, #tpu.memory_space<vmem>>, vector<16x1408xf32>,
    } else {
    }
    %c0 = arith.constant 0 : index
    %c0_1 = arith.constant 0 : index
    %3 = vector.load %arg7[%c0, %c0_1] : memref<16x1408xf32, #tpu.memory_space<vmem>>, vector<16x1408xf32>
    %c0_2 = arith.constant 0 : index
    %c0_3 = arith.constant 0 : index
    %4 = vector.load %arg3[%c0_2, %c0_3] : memref<16x64xf32, #tpu.memory_space<vmem>>, vector<16x64xf32>
    %c0_4 = arith.constant 0 : index
    %c0_5 = arith.constant 0 : index
    %5 = vector.load %arg4[%c0_4, %c0_5] : memref<64x1408xf32, #tpu.memory_space<vmem>>, vector<64x1408xf32>
    %cst = arith.constant dense<0.000000e+00> : vector<16x1408xf32>
    %6 = tpu.matmul %4, %5, %cst {dimension_numbers = #tpu.dot_dimension_numbers<[1], [0], [0], [1], [0, 0, 1, 1], [], []>} : vector<16x64xf32>, vector<64x1408xf32>, vector<16x1408xf32> -> vector<16x1408xf32>
    %7 = arith.addf %3, %6 : vector<16x1408xf32>
    %c0_6 = arith.constant 0 : index
    %c0_7 = arith.constant 0 : index
    %8 = vector.load %arg7[%c0_6, %c0_7] : memref<16x1408xf32, #tpu.memory_space<vmem>>, vector<16x1408xf32>
    tpu.vector_store %arg7[%c0_6, %c0_7], %7 {strides = array<i32>} : memref<16x1408xf32, #tpu.memory_space<vmem>>, vector<16x1408xf32>,
    %c0_i32_8 = arith.constant 0 : i32
    %9 = arith.cmpi eq, %arg2, %c0_i32_8 : i32
    %10 = arith.extui %9 : i1 to i32
    %c0_i32_9 = arith.constant 0 : i32
    %11 = arith.cmpi ne, %10, %c0_i32_9 : i32
    scf.if %11 {
      %c0_10 = arith.constant 0 : index
      %c0_11 = arith.constant 0 : index
      %12 = vector.load %arg7[%c0_10, %c0_11] : memref<16x1408xf32, #tpu.memory_space<vmem>>, vector<16x1408xf32>
      %c0_12 = arith.constant 0 : index
      %c0_13 = arith.constant 0 : index
      %13 = vector.load %arg5[%c0_12, %c0_13] : memref<1x1408xf32, #tpu.memory_space<vmem>>, vector<1x1408xf32>
      %14 = vector.broadcast %13 : vector<1x1408xf32> to vector<16x1408xf32>
      %15 = arith.addf %12, %14 : vector<16x1408xf32>
      %c0_14 = arith.constant 0 : index
      %c0_15 = arith.constant 0 : index
      %16 = vector.load %arg6[%c0_14, %c0_15] : memref<16x1408xf32, #tpu.memory_space<vmem>>, vector<16x1408xf32>
      tpu.vector_store %arg6[%c0_14, %c0_15], %15 {strides = array<i32>} : memref<16x1408xf32, #tpu.memory_space<vmem>>, vector<16x1408xf32>,
    } else {
    }
    return
  }
  func.func @transform_0(%arg0: i32, %arg1: i32, %arg2: i32) -> (i32, i32) {
    %c0_i32 = arith.constant 0 : i32
    return %arg0, %arg2 : i32, i32
  }
  func.func @transform_1(%arg0: i32, %arg1: i32, %arg2: i32) -> (i32, i32) {
    %c0_i32 = arith.constant 0 : i32
    return %arg2, %arg1 : i32, i32
  }
  func.func @transform_2(%arg0: i32, %arg1: i32, %arg2: i32) -> (i32, i32) {
    %c0_i32 = arith.constant 0 : i32
    %c0_i32_0 = arith.constant 0 : i32
    return %c0_i32, %arg1 : i32, i32
  }
  func.func @transform_3(%arg0: i32, %arg1: i32, %arg2: i32) -> (i32, i32) {
    %c0_i32 = arith.constant 0 : i32
    return %arg0, %arg1 : i32, i32
  }
}

module attributes {stable_mosaic.version = 11 : i64} {
  func.func @_fused_tail_kernel(%arg0: memref<14x2500xf32, #tpu.memory_space<vmem>>, %arg1: memref<14x2500xf32, #tpu.memory_space<vmem>>, %arg2: memref<14x1xf32, #tpu.memory_space<vmem>>, %arg3: memref<14x2500xf32, #tpu.memory_space<vmem>>) attributes {dimension_semantics = [], scalar_prefetch = 0 : i64, scratch_operands = 0 : i64, tpu.core_type = #tpu.core_type<tc>} {
    %c0 = arith.constant 0 : index
    %c0_0 = arith.constant 0 : index
    %0 = vector.load %arg0[%c0, %c0_0] : memref<14x2500xf32, #tpu.memory_space<vmem>>, vector<14x2500xf32>
    %c0_1 = arith.constant 0 : index
    %c0_2 = arith.constant 0 : index
    %1 = vector.load %arg1[%c0_1, %c0_2] : memref<14x2500xf32, #tpu.memory_space<vmem>>, vector<14x2500xf32>
    %2 = arith.addf %0, %1 : vector<14x2500xf32>
    %c0_3 = arith.constant 0 : index
    %c0_4 = arith.constant 0 : index
    %3 = vector.load %arg2[%c0_3, %c0_4] : memref<14x1xf32, #tpu.memory_space<vmem>>, vector<14x1xf32>
    %4 = vector.broadcast %3 : vector<14x1xf32> to vector<14x2500xf32>
    %5 = arith.addf %2, %4 : vector<14x2500xf32>
    %6 = math.tanh %5 : vector<14x2500xf32>
    %c0_5 = arith.constant 0 : index
    %c0_6 = arith.constant 0 : index
    %7 = vector.load %arg3[%c0_5, %c0_6] : memref<14x2500xf32, #tpu.memory_space<vmem>>, vector<14x2500xf32>
    tpu.vector_store %arg3[%c0_5, %c0_6], %6 {strides = array<i32>} : memref<14x2500xf32, #tpu.memory_space<vmem>>, vector<14x2500xf32>,
    return
  }
}

</mosaic_0001>

<llo_original>
// kernel: model_forward.3
$region0: #{model_forward.3}
  #allocation0 [shape = 'u32[]', space=smem, size = 0x4, offset = 0x4, fixed_abs, tag = 'smem constant byte address 0x4 - core index']
  #allocation1 [shape = 'u32[72,128]{1,0:T(1,128)}', space=vmem, size = 0x9000, scoped, tag = 'internal scratch']
  #allocation2 [shape = 'f32[16,64]{1,0:T(8,128)}', space=vmem, size = 0x2000, scoped, tag = 'scratch operand']
  %s0 = inlined_call_operand.vmem [shape: f32[16,24576], index: 0, kind: input, shape index: {}]
  %s1 = inlined_call_operand.vmem [shape: f32[24576,64], index: 1, kind: input, shape index: {}]
  %s2 = inlined_call_operand.vmem [shape: f32[1,64], index: 2, kind: input, shape index: {}]
  %s3 = inlined_call_operand.vmem [shape: f32[16,64], index: 3, kind: output, shape index: {}]
  %s4 = sld [smem:[#allocation0]]
  $region76: #{model_forward.3} parent=0
    _
  %s6 = ssub.s32 1, %s4
  %s7 = scalar_select 0, %s6, %s4
  $region1: #{model_forward.3} parent=0
    #allocation3 [shape = 'u8[262144]{0}', space=vmem, size = 0x40000, scoped, tag = 'input window, operand 0']
    loop: start=0, step=1, limit=14
    $region2: #{model_forward.3} parent=1 // loop_pre_header
      _
    $region3: #{model_forward.3} parent=1 // loop_header
      %s9 = sphi 0, %s13
      %p10 = scmp.ge.s32.totalorder %s9, 14
      %s16 = sphi 0, %s35
      %s17 = sphi 0, %s31
      %s18 = sphi 0, %s27
      %s19 = sphi 0, %s16
      %s20 = sphi 0, %s17
      %s21 = sphi 0, %s18
      %s22 = sphi 0, %s19
      %s23 = sphi 0, %s20
      %s24 = sphi 0, %s21
      %s40 = sphi 0, %s42
      %s43 = sphi 0, %s40
      %s44 = sphi 0, %s43
      %s60 = sphi 0, %s44
      %s68 = sphi 0, %s70
      %s71 = sphi 0, %s68
      %s72 = sphi 0, %s71
      %s88 = sphi 0, %s72
      %s94 = sphi 0, %s96
      %s97 = sphi 0, %s94
      %s98 = sphi 0, %s97
      %s114 = sphi 0, %s98
      %s122 = sphi 0, %s124
      %s125 = sphi 0, %s122
      %s126 = sphi 0, %s125
      %s142 = sphi 0, %s126
    $region4: #{model_forward.3} parent=1 // loop_header_branch
      %12 = sbr.rel (%p10) target = $region8
    $region5: #{model_forward.3} parent=1 // loop_body
      %s14 = ssub.s32 %s9, 1
      %s15 = ssub.s32 %s9, 2
      %s25 = sadd.s32 1, %s18
      %p26 = scmp.ge.s32.totalorder %s25, 12
      %s27 = scalar_select %p26, 0, %s25
      %s28 = sadd.s32 1, %s17
      %s29 = scalar_select %p26, %s28, %s17
      %p30 = scmp.ge.s32.totalorder %s29, 1
      %s31 = scalar_select %p30, 0, %s29
      %s32 = sadd.s32 1, %s16
      %s33 = scalar_select %p30, %s32, %s16
      %p34 = scmp.ge.s32.totalorder %s33, 1
      %s35 = scalar_select %p34, 0, %s33
      %s36 = ssub.s32 %s16, %s35
      %s37 = ssub.s32 %s18, %s27
      %s38 = sor.u32 %s36, %s37
      %p39 = scmp.eq.s32.totalorder %s38, 0
      %s41 = sadd.s32 %s40, 1
      %s42 = scalar_select %p39, %s40, %s41
      %p45 = pneg %p39
      %p46 = scmp.eq.s32.totalorder %s9, 11
      %p47 = por %p45, %p46
      %p48 = scmp.ne.s32.totalorder %s40, %s43
      %p49 = scmp.eq.s32.totalorder %s9, 0
      %p50 = por %p48, %p49
      %p51 = scmp.ne.s32.totalorder %s40, %s43
      %p52 = scmp.eq.s32.totalorder %s14, 11
      %p53 = por %p51, %p52
      %p54 = scmp.ne.s32.totalorder %s43, %s44
      %p55 = scmp.eq.s32.totalorder %s14, 0
      %p56 = por %p54, %p55
      %p57 = scmp.ne.s32.totalorder %s43, %s44
      %p58 = scmp.eq.s32.totalorder %s15, 11
      %p59 = por %p57, %p58
      %p61 = scmp.ne.s32.totalorder %s44, %s60
      %p62 = scmp.eq.s32.totalorder %s15, 0
      %p63 = por %p61, %p62
      %s64 = ssub.s32 %s18, %s27
      %s65 = ssub.s32 %s17, %s31
      %s66 = sor.u32 %s64, %s65
      %p67 = scmp.eq.s32.totalorder %s66, 0
      %s69 = sadd.s32 %s68, 1
      %s70 = scalar_select %p67, %s68, %s69
      %p73 = pneg %p67
      %p74 = scmp.eq.s32.totalorder %s9, 11
      %p75 = por %p73, %p74
      %p76 = scmp.ne.s32.totalorder %s68, %s71
      %p77 = scmp.eq.s32.totalorder %s9, 0
      %p78 = por %p76, %p77
      %p79 = scmp.ne.s32.totalorder %s68, %s71
      %p80 = scmp.eq.s32.totalorder %s14, 11
      %p81 = por %p79, %p80
      %p82 = scmp.ne.s32.totalorder %s71, %s72
      %p83 = scmp.eq.s32.totalorder %s14, 0
      %p84 = por %p82, %p83
      %p85 = scmp.ne.s32.totalorder %s71, %s72
      %p86 = scmp.eq.s32.totalorder %s15, 11
      %p87 = por %p85, %p86
      %p89 = scmp.ne.s32.totalorder %s72, %s88
      %p90 = scmp.eq.s32.totalorder %s15, 0
      %p91 = por %p89, %p90
      %s92 = ssub.s32 %s17, %s31
      %p93 = scmp.eq.s32.totalorder %s92, 0
      %s95 = sadd.s32 %s94, 1
      %s96 = scalar_select %p93, %s94, %s95
      %p99 = pneg %p93
      %p100 = scmp.eq.s32.totalorder %s9, 11
      %p101 = por %p99, %p100
      %p102 = scmp.ne.s32.totalorder %s94, %s97
      %p103 = scmp.eq.s32.totalorder %s9, 0
      %p104 = por %p102, %p103
      %p105 = scmp.ne.s32.totalorder %s94, %s97
      %p106 = scmp.eq.s32.totalorder %s14, 11
      %p107 = por %p105, %p106
      %p108 = scmp.ne.s32.totalorder %s97, %s98
      %p109 = scmp.eq.s32.totalorder %s14, 0
      %p110 = por %p108, %p109
      %p111 = scmp.ne.s32.totalorder %s97, %s98
      %p112 = scmp.eq.s32.totalorder %s15, 11
      %p113 = por %p111, %p112
      %p115 = scmp.ne.s32.totalorder %s98, %s114
      %p116 = scmp.eq.s32.totalorder %s15, 0
      %p117 = por %p115, %p116
      %s118 = ssub.s32 %s16, %s35
      %s119 = ssub.s32 %s17, %s31
      %s120 = sor.u32 %s118, %s119
      %p121 = scmp.eq.s32.totalorder %s120, 0
      %s123 = sadd.s32 %s122, 1
      %s124 = scalar_select %p121, %s122, %s123
      %p127 = pneg %p121
      %p128 = scmp.eq.s32.totalorder %s9, 11
      %p129 = por %p127, %p128
      %p130 = scmp.ne.s32.totalorder %s122, %s125
      %p131 = scmp.eq.s32.totalorder %s9, 0
      %p132 = por %p130, %p131
      %p133 = scmp.ne.s32.totalorder %s122, %s125
      %p134 = scmp.eq.s32.totalorder %s14, 11
      %p135 = por %p133, %p134
      %p136 = scmp.ne.s32.totalorder %s125, %s126
      %p137 = scmp.eq.s32.totalorder %s14, 0
      %p138 = por %p136, %p137
      %p139 = scmp.ne.s32.totalorder %s125, %s126
      %p140 = scmp.eq.s32.totalorder %s15, 11
      %p141 = por %p139, %p140
      %p143 = scmp.ne.s32.totalorder %s126, %s142
      %p144 = scmp.eq.s32.totalorder %s15, 0
      %p145 = por %p143, %p144
      %p146 = scmp.le.s32.totalorder 1, %s9
      %p147 = scmp.lt.s32.totalorder %s9, 13
      %p148 = pnand %p146, %p147
      %p149 = pneg %p148
      // Predicated region
      $region9: #{model_forward.3} parent=5 // pred_check
        _
      $region10: #{model_forward.3} parent=5 // pred_check_branch
        %151 = sbr.rel (%p148) target = $region12
      $region11: #{model_forward.3} parent=5 // pred_region
        %s152 = ssub.s32 %s9, 1
        // Predicated region
        $region13: #{model_forward.3} parent=11 // pred_check
          %p153 = pneg %p110
        $region14: #{model_forward.3} parent=11 // pred_check_branch
          %155 = sbr.rel (%p153) target = $region16
        $region15: #{model_forward.3} parent=11 // pred_region
          %p156 = scmp.lt.s32.totalorder %s20, 0
          %s157 = scalar_select %p156, %s20, 0
          %s158 = scalar_lea.vmem %s2, %s157
        $region16: #{model_forward.3} parent=11 // pred_fallthru
          _
      $region12: #{model_forward.3} parent=5 // pred_fallthru
        _
      %p159 = scmp.lt.s32.totalorder %s9, 12
      // Predicated region
      $region17: #{model_forward.3} parent=5 // pred_check
        %p160 = pneg %p159
      $region18: #{model_forward.3} parent=5 // pred_check_branch
        %162 = sbr.rel (%p160) target = $region20
      $region19: #{model_forward.3} parent=5 // pred_region
        // Predicated region
        $region21: #{model_forward.3} parent=19 // pred_check
          %p163 = pneg %p50
        $region22: #{model_forward.3} parent=19 // pred_check_branch
          %165 = sbr.rel (%p163) target = $region24
        $region23: #{model_forward.3} parent=19 // pred_region
          %s166 = sand.u32 %s40, 1
          %s167 = sand.u32 %s40, 1
          %s168 = smul.addr %s167, 256
          %s169 = scalar_lea.vmem [#allocation3], %s168
          %s170 = smul.u32 2, %s16
          %s171 = smul.u32 16, %s18
          %s172 = smul.addr %s170, 192
          %s173 = sadd.s32 %s171, %s172
          %s174 = smul.addr %s173, 8
          %s175 = scalar_lea.vmem %s0, %s174
          // Predicated region
          $region25: #{model_forward.3} parent=23 // pred_check
            _
          $region26: #{model_forward.3} parent=23 // pred_check_branch
            %177 = sbr.rel (0) target = $region28
          $region27: #{model_forward.3} parent=23 // pred_region
            // Predicated region
            $region29: #{model_forward.3} parent=27 // pred_check
              _
            $region30: #{model_forward.3} parent=27 // pred_check_branch
              %179 = sbr.rel (0) target = $region32
            $region31: #{model_forward.3} parent=27 // pred_region
              loop: start=0, step=1, limit=1
              $region33: #{model_forward.3} parent=31 // loop_pre_header
                _
              $region34: #{model_forward.3} parent=31 // loop_header
                %s181 = sphi 0, %s185
                %p182 = scmp.ge.s32.totalorder %s181, 1
                %s186 = sphi %s175, %s175
                %s187 = sphi %s169, %s169
              $region35: #{model_forward.3} parent=31 // loop_header_branch
                %184 = sbr.rel (%p182) target = $region39
              $region36: #{model_forward.3} parent=31 // loop_body
                %v188 = vld [vmem:[%s186] sm:$0xff]
                %189 = vst [vmem:[%s187] sm:$0xff] %v188
                %v190 = vld [vmem:[%s186 + $0x8] sm:$0xff]
                %191 = vst [vmem:[%s187 + $0x8] sm:$0xff] %v190
                %v192 = vld [vmem:[%s186 + $0x10] sm:$0xff]
                %193 = vst [vmem:[%s187 + $0x10] sm:$0xff] %v192
                %v194 = vld [vmem:[%s186 + $0x18] sm:$0xff]
                %195 = vst [vmem:[%s187 + $0x18] sm:$0xff] %v194
                %v196 = vld [vmem:[%s186 + $0x20] sm:$0xff]
                %197 = vst [vmem:[%s187 + $0x20] sm:$0xff] %v196
                %v198 = vld [vmem:[%s186 + $0x28] sm:$0xff]
                %199 = vst [vmem:[%s187 + $0x28] sm:$0xff] %v198
                %v200 = vld [vmem:[%s186 + $0x30] sm:$0xff]
                %201 = vst [vmem:[%s187 + $0x30] sm:$0xff] %v200
                %v202 = vld [vmem:[%s186 + $0x38] sm:$0xff]
                %203 = vst [vmem:[%s187 + $0x38] sm:$0xff] %v202
                %v204 = vld [vmem:[%s186 + $0x40] sm:$0xff]
                %205 = vst [vmem:[%s187 + $0x40] sm:$0xff] %v204
                %v206 = vld [vmem:[%s186 + $0x48] sm:$0xff]
                %207 = vst [vmem:[%s187 + $0x48] sm:$0xff] %v206
                %v208 = vld [vmem:[%s186 + $0x50] sm:$0xff]
                %209 = vst [vmem:[%s187 + $0x50] sm:$0xff] %v208
                %v210 = vld [vmem:[%s186 + $0x58] sm:$0xff]
                %211 = vst [vmem:[%s187 + $0x58] sm:$0xff] %v210
                %v212 = vld [vmem:[%s186 + $0x60] sm:$0xff]
                %213 = vst [vmem:[%s187 + $0x60] sm:$0xff] %v212
                %v214 = vld [vmem:[%s186 + $0x68] sm:$0xff]
                %215 = vst [vmem:[%s187 + $0x68] sm:$0xff] %v214
                %v216 = vld [vmem:[%s186 + $0x70] sm:$0xff]
                %217 = vst [vmem:[%s187 + $0x70] sm:$0xff] %v216
                %v218 = vld [vmem:[%s186 + $0x78] sm:$0xff]
                %219 = vst [vmem:[%s187 + $0x78] sm:$0xff] %v218
                %v220 = vld [vmem:[%s186 + $0x600] sm:$0xff]
                %221 = vst [vmem:[%s187 + $0x80] sm:$0xff] %v220
                %v222 = vld [vmem:[%s186 + $0x608] sm:$0xff]
                %223 = vst [vmem:[%s187 + $0x88] sm:$0xff] %v222
                %v224 = vld [vmem:[%s186 + $0x610] sm:$0xff]
                %225 = vst [vmem:[%s187 + $0x90] sm:$0xff] %v224
                %v226 = vld [vmem:[%s186 + $0x618] sm:$0xff]
                %227 = vst [vmem:[%s187 + $0x98] sm:$0xff] %v226
                %v228 = vld [vmem:[%s186 + $0x620] sm:$0xff]
                %229 = vst [vmem:[%s187 + $0xa0] sm:$0xff] %v228
                %v230 = vld [vmem:[%s186 + $0x628] sm:$0xff]
                %231 = vst [vmem:[%s187 + $0xa8] sm:$0xff] %v230
                %v232 = vld [vmem:[%s186 + $0x630] sm:$0xff]
                %233 = vst [vmem:[%s187 + $0xb0] sm:$0xff] %v232
                %v234 = vld [vmem:[%s186 + $0x638] sm:$0xff]
                %235 = vst [vmem:[%s187 + $0xb8] sm:$0xff] %v234
                %v236 = vld [vmem:[%s186 + $0x640] sm:$0xff]
                %237 = vst [vmem:[%s187 + $0xc0] sm:$0xff] %v236
                %v238 = vld [vmem:[%s186 + $0x648] sm:$0xff]
                %239 = vst [vmem:[%s187 + $0xc8] sm:$0xff] %v238
                %v240 = vld [vmem:[%s186 + $0x650] sm:$0xff]
                %241 = vst [vmem:[%s187 + $0xd0] sm:$0xff] %v240
                %v242 = vld [vmem:[%s186 + $0x658] sm:$0xff]
                %243 = vst [vmem:[%s187 + $0xd8] sm:$0xff] %v242
                %v244 = vld [vmem:[%s186 + $0x660] sm:$0xff]
                %245 = vst [vmem:[%s187 + $0xe0] sm:$0xff] %v244
                %v246 = vld [vmem:[%s186 + $0x668] sm:$0xff]
                %247 = vst [vmem:[%s187 + $0xe8] sm:$0xff] %v246
                %v248 = vld [vmem:[%s186 + $0x670] sm:$0xff]
                %249 = vst [vmem:[%s187 + $0xf0] sm:$0xff] %v248
                %v250 = vld [vmem:[%s186 + $0x678] sm:$0xff]
                %251 = vst [vmem:[%s187 + $0xf8] sm:$0xff] %v250
              $region37: #{model_forward.3} parent=31 // loop_footer
                %s185 = sadd.s32 1, %s181
              $region38: #{model_forward.3} parent=31 // loop_footer_branch
                %180 = sbr.rel target = $region34
              $region39: #{model_forward.3} parent=31 // loop_exit
                _
            $region32: #{model_forward.3} parent=27 // pred_fallthru
              _
            // Predicated region
            $region40: #{model_forward.3} parent=27 // pred_check
              _
            $region41: #{model_forward.3} parent=27 // pred_check_branch
              %253 = sbr.rel target = $region43
            $region42: #{model_forward.3} parent=27 // pred_region
              _
            $region43: #{model_forward.3} parent=27 // pred_fallthru
              _
          $region28: #{model_forward.3} parent=23 // pred_fallthru
            _
          %254 = vnop
        $region24: #{model_forward.3} parent=19 // pred_fallthru
          _
        // Predicated region
        $region44: #{model_forward.3} parent=19 // pred_check
          %p255 = pneg %p78
        $region45: #{model_forward.3} parent=19 // pred_check_branch
          %257 = sbr.rel (%p255) target = $region47
        $region46: #{model_forward.3} parent=19 // pred_region
          %s258 = smul.u32 256, %s18
          %p259 = scmp.lt.s32.totalorder %s258, 3071
          %s260 = scalar_select %p259, %s258, 3071
          %p261 = scmp.lt.s32.totalorder %s17, 0
          %s262 = scalar_select %p261, %s17, 0
          %s263 = sadd.s32 %s262, %s260
          %s264 = smul.addr %s263, 8
          %s265 = scalar_lea.vmem %s1, %s264
          %s266 = smul.u32 256, %s18
        $region47: #{model_forward.3} parent=19 // pred_fallthru
          _
      $region20: #{model_forward.3} parent=5 // pred_fallthru
        _
      %p267 = scmp.le.s32.totalorder 1, %s9
      %p268 = scmp.lt.s32.totalorder %s9, 13
      %p269 = pnand %p267, %p268
      %p270 = pneg %p269
      // Predicated region
      $region48: #{model_forward.3} parent=5 // pred_check
        _
      $region49: #{model_forward.3} parent=5 // pred_check_branch
        %272 = sbr.rel (%p269) target = $region51
      $region50: #{model_forward.3} parent=5 // pred_region
        %s273 = ssub.s32 %s9, 1
        %s274 = sand.u32 %s43, 1
        %s275 = sand.u32 %s43, 1
        %s276 = smul.addr %s275, 256
        %s277 = scalar_lea.vmem [#allocation3], %s276
        // Predicated region
        $region52: #{model_forward.3} parent=50 // pred_check
          %p278 = pneg %p56
        $region53: #{model_forward.3} parent=50 // pred_check_branch
          %280 = sbr.rel (%p278) target = $region55
        $region54: #{model_forward.3} parent=50 // pred_region
          _
        $region55: #{model_forward.3} parent=50 // pred_fallthru
          _
        %s281 = sand.u32 %s43, 1
        %s282 = sand.u32 %s43, 1
        %s283 = smul.addr %s282, 256
        %s284 = scalar_lea.vmem [#allocation3], %s283
        %p285 = pneg %p56
        %p286 = pneg %p53
        %s287 = smul.u32 256, %s21
        %p288 = scmp.lt.s32.totalorder %s287, 3071
        %s289 = scalar_select %p288, %s287, 3071
        %p290 = scmp.lt.s32.totalorder %s20, 0
        %s291 = scalar_select %p290, %s20, 0
        %s292 = sadd.s32 %s291, %s289
        %s293 = smul.addr %s292, 8
        %s294 = scalar_lea.vmem %s1, %s293
        %p295 = pneg %p84
        %p296 = pneg %p81
        %p297 = scmp.lt.s32.totalorder %s20, 0
        %s298 = scalar_select %p297, %s20, 0
        %s299 = scalar_lea.vmem %s2, %s298
        %p300 = pneg %p110
        %p301 = pneg %p107
        %p302 = pneg %p138
        %p303 = pneg %p135
        %s304 = smul.u32 2, %s19
        %p305 = scmp.lt.s32.totalorder %s304, 1
        %s306 = scalar_select %p305, %s304, 1
        %p307 = scmp.lt.s32.totalorder %s20, 0
        %s308 = scalar_select %p307, %s20, 0
        %s309 = sadd.s32 %s308, %s306
        %s310 = smul.addr %s309, 8
        %s311 = scalar_lea.vmem %s3, %s310
        %s312 = smul.u32 2, %s19
        %s313 = smul.u32 16, %s21
        %s314 = smul.u32 256, %s21
        %p315 = scmp.lt.s32.totalorder %s314, 3071
        %s316 = scalar_select %p315, %s314, 3071
        %p317 = scmp.lt.s32.totalorder %s20, 0
        %s318 = scalar_select %p317, %s20, 0
        %s319 = sadd.s32 %s318, %s316
        %s320 = smul.addr %s319, 8
        %s321 = scalar_lea.vmem %s1, %s320
        %s322 = smul.u32 256, %s21
        %p323 = scmp.lt.s32.totalorder %s20, 0
        %s324 = scalar_select %p323, %s20, 0
        %s325 = scalar_lea.vmem %s2, %s324
        %s326 = smul.u32 2, %s19
        %p327 = scmp.lt.s32.totalorder %s326, 1
        %s328 = scalar_select %p327, %s326, 1
        %p329 = scmp.lt.s32.totalorder %s20, 0
        %s330 = scalar_select %p329, %s20, 0
        %s331 = sadd.s32 %s330, %s328
        %s332 = smul.addr %s331, 8
        %s333 = scalar_lea.vmem %s3, %s332
        %s334 = smul.u32 2, %s19
        %p335 = scmp.eq.s32.totalorder %s21, 0
        // Predicated region
        $region56: #{model_forward.3} parent=50 // pred_check
          %p336 = pneg %p335
        $region57: #{model_forward.3} parent=50 // pred_check_branch
          %338 = sbr.rel (%p336) target = $region59
        $region58: #{model_forward.3} parent=50 // pred_region
          %vm339 = vcmask 523264
          %340 = vst.msk [vmem:[#allocation2] sm:$0xff] %vm339, 0.0
          %341 = vst.msk [vmem:[#allocation2 + $0x8] sm:$0xff] %vm339, 0.0
        $region59: #{model_forward.3} parent=50 // pred_fallthru
          _
        %v342 = vld [vmem:[#allocation2] sm:$0xff]
        %v343 = vld [vmem:[#allocation2 + $0x8] sm:$0xff]
        %v344 = vld [vmem:[%s277] sm:$0xff]
        %v345 = vld [vmem:[%s277 + $0x8] sm:$0xff]
        %v346 = vld [vmem:[%s277 + $0x10] sm:$0xff]
        %v347 = vld [vmem:[%s277 + $0x18] sm:$0xff]
        %v348 = vld [vmem:[%s277 + $0x20] sm:$0xff]
        %v349 = vld [vmem:[%s277 + $0x28] sm:$0xff]
        %v350 = vld [vmem:[%s277 + $0x30] sm:$0xff]
        %v351 = vld [vmem:[%s277 + $0x38] sm:$0xff]
        %v352 = vld [vmem:[%s277 + $0x40] sm:$0xff]
        %v353 = vld [vmem:[%s277 + $0x48] sm:$0xff]
        %v354 = vld [vmem:[%s277 + $0x50] sm:$0xff]
        %v355 = vld [vmem:[%s277 + $0x58] sm:$0xff]
        %v356 = vld [vmem:[%s277 + $0x60] sm:$0xff]
        %v357 = vld [vmem:[%s277 + $0x68] sm:$0xff]
        %v358 = vld [vmem:[%s277 + $0x70] sm:$0xff]
        %v359 = vld [vmem:[%s277 + $0x78] sm:$0xff]
        %v360 = vld [vmem:[%s277 + $0x80] sm:$0xff]
        %v361 = vld [vmem:[%s277 + $0x88] sm:$0xff]
        %v362 = vld [vmem:[%s277 + $0x90] sm:$0xff]
        %v363 = vld [vmem:[%s277 + $0x98] sm:$0xff]
        %v364 = vld [vmem:[%s277 + $0xa0] sm:$0xff]
        %v365 = vld [vmem:[%s277 + $0xa8] sm:$0xff]
        %v366 = vld [vmem:[%s277 + $0xb0] sm:$0xff]
        %v367 = vld [vmem:[%s277 + $0xb8] sm:$0xff]
        %v368 = vld [vmem:[%s277 + $0xc0] sm:$0xff]
        %v369 = vld [vmem:[%s277 + $0xc8] sm:$0xff]
        %v370 = vld [vmem:[%s277 + $0xd0] sm:$0xff]
        %v371 = vld [vmem:[%s277 + $0xd8] sm:$0xff]
        %v372 = vld [vmem:[%s277 + $0xe0] sm:$0xff]
        %v373 = vld [vmem:[%s277 + $0xe8] sm:$0xff]
        %v374 = vld [vmem:[%s277 + $0xf0] sm:$0xff]
        %v375 = vld [vmem:[%s277 + $0xf8] sm:$0xff]
        %v376 = vld [vmem:[%s321] sm:$0xff]
        %v377 = vld [vmem:[%s321 + $0x8] sm:$0xff]
        %v378 = vld [vmem:[%s321 + $0x10] sm:$0xff]
        %v379 = vld [vmem:[%s321 + $0x18] sm:$0xff]
        %v380 = vld [vmem:[%s321 + $0x20] sm:$0xff]
        %v381 = vld [vmem:[%s321 + $0x28] sm:$0xff]
        %v382 = vld [vmem:[%s321 + $0x30] sm:$0xff]
        %v383 = vld [vmem:[%s321 + $0x38] sm:$0xff]
        %v384 = vld [vmem:[%s321 + $0x40] sm:$0xff]
        %v385 = vld [vmem:[%s321 + $0x48] sm:$0xff]
        %v386 = vld [vmem:[%s321 + $0x50] sm:$0xff]
        %v387 = vld [vmem:[%s321 + $0x58] sm:$0xff]
        %v388 = vld [vmem:[%s321 + $0x60] sm:$0xff]
        %v389 = vld [vmem:[%s321 + $0x68] sm:$0xff]
        %v390 = vld [vmem:[%s321 + $0x70] sm:$0xff]
        %v391 = vld [vmem:[%s321 + $0x78] sm:$0xff]
        %v392 = vld [vmem:[%s321 + $0x80] sm:$0xff]
        %v393 = vld [vmem:[%s321 + $0x88] sm:$0xff]
        %v394 = vld [vmem:[%s321 + $0x90] sm:$0xff]
        %v395 = vld [vmem:[%s321 + $0x98] sm:$0xff]
        %v396 = vld [vmem:[%s321 + $0xa0] sm:$0xff]
        %v397 = vld [vmem:[%s321 + $0xa8] sm:$0xff]
        %v398 = vld [vmem:[%s321 + $0xb0] sm:$0xff]
        %v399 = vld [vmem:[%s321 + $0xb8] sm:$0xff]
        %v400 = vld [vmem:[%s321 + $0xc0] sm:$0xff]
        %v401 = vld [vmem:[%s321 + $0xc8] sm:$0xff]
        %v402 = vld [vmem:[%s321 + $0xd0] sm:$0xff]
        %v403 = vld [vmem:[%s321 + $0xd8] sm:$0xff]
        %v404 = vld [vmem:[%s321 + $0xe0] sm:$0xff]
        %v405 = vld [vmem:[%s321 + $0xe8] sm:$0xff]
        %v406 = vld [vmem:[%s321 + $0xf0] sm:$0xff]
        %v407 = vld [vmem:[%s321 + $0xf8] sm:$0xff]
        %v408 = vld [vmem:[%s321 + $0x100] sm:$0xff]
        %v409 = vld [vmem:[%s321 + $0x108] sm:$0xff]
        %v410 = vld [vmem:[%s321 + $0x110] sm:$0xff]
        %v411 = vld [vmem:[%s321 + $0x118] sm:$0xff]
        %v412 = vld [vmem:[%s321 + $0x120] sm:$0xff]
        %v413 = vld [vmem:[%s321 + $0x128] sm:$0xff]
        %v414 = vld [vmem:[%s321 + $0x130] sm:$0xff]
        %v415 = vld [vmem:[%s321 + $0x138] sm:$0xff]
        %v416 = vld [vmem:[%s321 + $0x140] sm:$0xff]
        %v417 = vld [vmem:[%s321 + $0x148] sm:$0xff]
        %v418 = vld [vmem:[%s321 + $0x150] sm:$0xff]
        %v419 = vld [vmem:[%s321 + $0x158] sm:$0xff]
        %v420 = vld [vmem:[%s321 + $0x160] sm:$0xff]
        %v421 = vld [vmem:[%s321 + $0x168] sm:$0xff]
        %v422 = vld [vmem:[%s321 + $0x170] sm:$0xff]
        %v423 = vld [vmem:[%s321 + $0x178] sm:$0xff]
        %v424 = vld [vmem:[%s321 + $0x180] sm:$0xff]
        %v425 = vld [vmem:[%s321 + $0x188] sm:$0xff]
        %v426 = vld [vmem:[%s321 + $0x190] sm:$0xff]
        %v427 = vld [vmem:[%s321 + $0x198] sm:$0xff]
        %v428 = vld [vmem:[%s321 + $0x1a0] sm:$0xff]
        %v429 = vld [vmem:[%s321 + $0x1a8] sm:$0xff]
        %v430 = vld [vmem:[%s321 + $0x1b0] sm:$0xff]
        %v431 = vld [vmem:[%s321 + $0x1b8] sm:$0xff]
        %v432 = vld [vmem:[%s321 + $0x1c0] sm:$0xff]
        %v433 = vld [vmem:[%s321 + $0x1c8] sm:$0xff]
        %v434 = vld [vmem:[%s321 + $0x1d0] sm:$0xff]
        %v435 = vld [vmem:[%s321 + $0x1d8] sm:$0xff]
        %v436 = vld [vmem:[%s321 + $0x1e0] sm:$0xff]
        %v437 = vld [vmem:[%s321 + $0x1e8] sm:$0xff]
        %v438 = vld [vmem:[%s321 + $0x1f0] sm:$0xff]
        %v439 = vld [vmem:[%s321 + $0x1f8] sm:$0xff]
        %v440 = vld [vmem:[%s321 + $0x200] sm:$0xff]
        %v441 = vld [vmem:[%s321 + $0x208] sm:$0xff]
        %v442 = vld [vmem:[%s321 + $0x210] sm:$0xff]
        %v443 = vld [vmem:[%s321 + $0x218] sm:$0xff]
        %v444 = vld [vmem:[%s321 + $0x220] sm:$0xff]
        %v445 = vld [vmem:[%s321 + $0x228] sm:$0xff]
        %v446 = vld [vmem:[%s321 + $0x230] sm:$0xff]
        %v447 = vld [vmem:[%s321 + $0x238] sm:$0xff]
        %v448 = vld [vmem:[%s321 + $0x240] sm:$0xff]
        %v449 = vld [vmem:[%s321 + $0x248] sm:$0xff]
        %v450 = vld [vmem:[%s321 + $0x250] sm:$0xff]
        %v451 = vld [vmem:[%s321 + $0x258] sm:$0xff]
        %v452 = vld [vmem:[%s321 + $0x260] sm:$0xff]
        %v453 = vld [vmem:[%s321 + $0x268] sm:$0xff]
        %v454 = vld [vmem:[%s321 + $0x270] sm:$0xff]
        %v455 = vld [vmem:[%s321 + $0x278] sm:$0xff]
        %v456 = vld [vmem:[%s321 + $0x280] sm:$0xff]
        %v457 = vld [vmem:[%s321 + $0x288] sm:$0xff]
        %v458 = vld [vmem:[%s321 + $0x290] sm:$0xff]
        %v459 = vld [vmem:[%s321 + $0x298] sm:$0xff]
        %v460 = vld [vmem:[%s321 + $0x2a0] sm:$0xff]
        %v461 = vld [vmem:[%s321 + $0x2a8] sm:$0xff]
        %v462 = vld [vmem:[%s321 + $0x2b0] sm:$0xff]
        %v463 = vld [vmem:[%s321 + $0x2b8] sm:$0xff]
        %v464 = vld [vmem:[%s321 + $0x2c0] sm:$0xff]
        %v465 = vld [vmem:[%s321 + $0x2c8] sm:$0xff]
        %v466 = vld [vmem:[%s321 + $0x2d0] sm:$0xff]
        %v467 = vld [vmem:[%s321 + $0x2d8] sm:$0xff]
        %v468 = vld [vmem:[%s321 + $0x2e0] sm:$0xff]
        %v469 = vld [vmem:[%s321 + $0x2e8] sm:$0xff]
        %v470 = vld [vmem:[%s321 + $0x2f0] sm:$0xff]
        %v471 = vld [vmem:[%s321 + $0x2f8] sm:$0xff]
        %v472 = vld [vmem:[%s321 + $0x300] sm:$0xff]
        %v473 = vld [vmem:[%s321 + $0x308] sm:$0xff]
        %v474 = vld [vmem:[%s321 + $0x310] sm:$0xff]
        %v475 = vld [vmem:[%s321 + $0x318] sm:$0xff]
        %v476 = vld [vmem:[%s321 + $0x320] sm:$0xff]
        %v477 = vld [vmem:[%s321 + $0x328] sm:$0xff]
        %v478 = vld [vmem:[%s321 + $0x330] sm:$0xff]
        %v479 = vld [vmem:[%s321 + $0x338] sm:$0xff]
        %v480 = vld [vmem:[%s321 + $0x340] sm:$0xff]
        %v481 = vld [vmem:[%s321 + $0x348] sm:$0xff]
        %v482 = vld [vmem:[%s321 + $0x350] sm:$0xff]
        %v483 = vld [vmem:[%s321 + $0x358] sm:$0xff]
        %v484 = vld [vmem:[%s321 + $0x360] sm:$0xff]
        %v485 = vld [vmem:[%s321 + $0x368] sm:$0xff]
        %v486 = vld [vmem:[%s321 + $0x370] sm:$0xff]
        %v487 = vld [vmem:[%s321 + $0x378] sm:$0xff]
        %v488 = vld [vmem:[%s321 + $0x380] sm:$0xff]
        %v489 = vld [vmem:[%s321 + $0x388] sm:$0xff]
        %v490 = vld [vmem:[%s321 + $0x390] sm:$0xff]
        %v491 = vld [vmem:[%s321 + $0x398] sm:$0xff]
        %v492 = vld [vmem:[%s321 + $0x3a0] sm:$0xff]
        %v493 = vld [vmem:[%s321 + $0x3a8] sm:$0xff]
        %v494 = vld [vmem:[%s321 + $0x3b0] sm:$0xff]
        %v495 = vld [vmem:[%s321 + $0x3b8] sm:$0xff]
        %v496 = vld [vmem:[%s321 + $0x3c0] sm:$0xff]
        %v497 = vld [vmem:[%s321 + $0x3c8] sm:$0xff]
        %v498 = vld [vmem:[%s321 + $0x3d0] sm:$0xff]
        %v499 = vld [vmem:[%s321 + $0x3d8] sm:$0xff]
        %v500 = vld [vmem:[%s321 + $0x3e0] sm:$0xff]
        %v501 = vld [vmem:[%s321 + $0x3e8] sm:$0xff]
        %v502 = vld [vmem:[%s321 + $0x3f0] sm:$0xff]
        %v503 = vld [vmem:[%s321 + $0x3f8] sm:$0xff]
        %v504 = vld [vmem:[%s321 + $0x400] sm:$0xff]
        %v505 = vld [vmem:[%s321 + $0x408] sm:$0xff]
        %v506 = vld [vmem:[%s321 + $0x410] sm:$0xff]
        %v507 = vld [vmem:[%s321 + $0x418] sm:$0xff]
        %v508 = vld [vmem:[%s321 + $0x420] sm:$0xff]
        %v509 = vld [vmem:[%s321 + $0x428] sm:$0xff]
        %v510 = vld [vmem:[%s321 + $0x430] sm:$0xff]
        %v511 = vld [vmem:[%s321 + $0x438] sm:$0xff]
        %v512 = vld [vmem:[%s321 + $0x440] sm:$0xff]
        %v513 = vld [vmem:[%s321 + $0x448] sm:$0xff]
        %v514 = vld [vmem:[%s321 + $0x450] sm:$0xff]
        %v515 = vld [vmem:[%s321 + $0x458] sm:$0xff]
        %v516 = vld [vmem:[%s321 + $0x460] sm:$0xff]
        %v517 = vld [vmem:[%s321 + $0x468] sm:$0xff]
        %v518 = vld [vmem:[%s321 + $0x470] sm:$0xff]
        %v519 = vld [vmem:[%s321 + $0x478] sm:$0xff]
        %v520 = vld [vmem:[%s321 + $0x480] sm:$0xff]
        %v521 = vld [vmem:[%s321 + $0x488] sm:$0xff]
        %v522 = vld [vmem:[%s321 + $0x490] sm:$0xff]
        %v523 = vld [vmem:[%s321 + $0x498] sm:$0xff]
        %v524 = vld [vmem:[%s321 + $0x4a0] sm:$0xff]
        %v525 = vld [vmem:[%s321 + $0x4a8] sm:$0xff]
        %v526 = vld [vmem:[%s321 + $0x4b0] sm:$0xff]
        %v527 = vld [vmem:[%s321 + $0x4b8] sm:$0xff]
        %v528 = vld [vmem:[%s321 + $0x4c0] sm:$0xff]
        %v529 = vld [vmem:[%s321 + $0x4c8] sm:$0xff]
        %v530 = vld [vmem:[%s321 + $0x4d0] sm:$0xff]
        %v531 = vld [vmem:[%s321 + $0x4d8] sm:$0xff]
        %v532 = vld [vmem:[%s321 + $0x4e0] sm:$0xff]
        %v533 = vld [vmem:[%s321 + $0x4e8] sm:$0xff]
        %v534 = vld [vmem:[%s321 + $0x4f0] sm:$0xff]
        %v535 = vld [vmem:[%s321 + $0x4f8] sm:$0xff]
        %v536 = vld [vmem:[%s321 + $0x500] sm:$0xff]
        %v537 = vld [vmem:[%s321 + $0x508] sm:$0xff]
        %v538 = vld [vmem:[%s321 + $0x510] sm:$0xff]
        %v539 = vld [vmem:[%s321 + $0x518] sm:$0xff]
        %v540 = vld [vmem:[%s321 + $0x520] sm:$0xff]
        %v541 = vld [vmem:[%s321 + $0x528] sm:$0xff]
        %v542 = vld [vmem:[%s321 + $0x530] sm:$0xff]
        %v543 = vld [vmem:[%s321 + $0x538] sm:$0xff]
        %v544 = vld [vmem:[%s321 + $0x540] sm:$0xff]
        %v545 = vld [vmem:[%s321 + $0x548] sm:$0xff]
        %v546 = vld [vmem:[%s321 + $0x550] sm:$0xff]
        %v547 = vld [vmem:[%s321 + $0x558] sm:$0xff]
        %v548 = vld [vmem:[%s321 + $0x560] sm:$0xff]
        %v549 = vld [vmem:[%s321 + $0x568] sm:$0xff]
        %v550 = vld [vmem:[%s321 + $0x570] sm:$0xff]
        %v551 = vld [vmem:[%s321 + $0x578] sm:$0xff]
        %v552 = vld [vmem:[%s321 + $0x580] sm:$0xff]
        %v553 = vld [vmem:[%s321 + $0x588] sm:$0xff]
        %v554 = vld [vmem:[%s321 + $0x590] sm:$0xff]
        %v555 = vld [vmem:[%s321 + $0x598] sm:$0xff]
        %v556 = vld [vmem:[%s321 + $0x5a0] sm:$0xff]
        %v557 = vld [vmem:[%s321 + $0x5a8] sm:$0xff]
        %v558 = vld [vmem:[%s321 + $0x5b0] sm:$0xff]
        %v559 = vld [vmem:[%s321 + $0x5b8] sm:$0xff]
        %v560 = vld [vmem:[%s321 + $0x5c0] sm:$0xff]
        %v561 = vld [vmem:[%s321 + $0x5c8] sm:$0xff]
        %v562 = vld [vmem:[%s321 + $0x5d0] sm:$0xff]
        %v563 = vld [vmem:[%s321 + $0x5d8] sm:$0xff]
        %v564 = vld [vmem:[%s321 + $0x5e0] sm:$0xff]
        %v565 = vld [vmem:[%s321 + $0x5e8] sm:$0xff]
        %v566 = vld [vmem:[%s321 + $0x5f0] sm:$0xff]
        %v567 = vld [vmem:[%s321 + $0x5f8] sm:$0xff]
        %v568 = vld [vmem:[%s321 + $0x600] sm:$0xff]
        %v569 = vld [vmem:[%s321 + $0x608] sm:$0xff]
        %v570 = vld [vmem:[%s321 + $0x610] sm:$0xff]
        %v571 = vld [vmem:[%s321 + $0x618] sm:$0xff]
        %v572 = vld [vmem:[%s321 + $0x620] sm:$0xff]
        %v573 = vld [vmem:[%s321 + $0x628] sm:$0xff]
        %v574 = vld [vmem:[%s321 + $0x630] sm:$0xff]
        %v575 = vld [vmem:[%s321 + $0x638] sm:$0xff]
        %v576 = vld [vmem:[%s321 + $0x640] sm:$0xff]
        %v577 = vld [vmem:[%s321 + $0x648] sm:$0xff]
        %v578 = vld [vmem:[%s321 + $0x650] sm:$0xff]
        %v579 = vld [vmem:[%s321 + $0x658] sm:$0xff]
        %v580 = vld [vmem:[%s321 + $0x660] sm:$0xff]
        %v581 = vld [vmem:[%s321 + $0x668] sm:$0xff]
        %v582 = vld [vmem:[%s321 + $0x670] sm:$0xff]
        %v583 = vld [vmem:[%s321 + $0x678] sm:$0xff]
        %v584 = vld [vmem:[%s321 + $0x680] sm:$0xff]
        %v585 = vld [vmem:[%s321 + $0x688] sm:$0xff]
        %v586 = vld [vmem:[%s321 + $0x690] sm:$0xff]
        %v587 = vld [vmem:[%s321 + $0x698] sm:$0xff]
        %v588 = vld [vmem:[%s321 + $0x6a0] sm:$0xff]
        %v589 = vld [vmem:[%s321 + $0x6a8] sm:$0xff]
        %v590 = vld [vmem:[%s321 + $0x6b0] sm:$0xff]
        %v591 = vld [vmem:[%s321 + $0x6b8] sm:$0xff]
        %v592 = vld [vmem:[%s321 + $0x6c0] sm:$0xff]
        %v593 = vld [vmem:[%s321 + $0x6c8] sm:$0xff]
        %v594 = vld [vmem:[%s321 + $0x6d0] sm:$0xff]
        %v595 = vld [vmem:[%s321 + $0x6d8] sm:$0xff]
        %v596 = vld [vmem:[%s321 + $0x6e0] sm:$0xff]
        %v597 = vld [vmem:[%s321 + $0x6e8] sm:$0xff]
        %v598 = vld [vmem:[%s321 + $0x6f0] sm:$0xff]
        %v599 = vld [vmem:[%s321 + $0x6f8] sm:$0xff]
        %v600 = vld [vmem:[%s321 + $0x700] sm:$0xff]
        %v601 = vld [vmem:[%s321 + $0x708] sm:$0xff]
        %v602 = vld [vmem:[%s321 + $0x710] sm:$0xff]
        %v603 = vld [vmem:[%s321 + $0x718] sm:$0xff]
        %v604 = vld [vmem:[%s321 + $0x720] sm:$0xff]
        %v605 = vld [vmem:[%s321 + $0x728] sm:$0xff]
        %v606 = vld [vmem:[%s321 + $0x730] sm:$0xff]
        %v607 = vld [vmem:[%s321 + $0x738] sm:$0xff]
        %v608 = vld [vmem:[%s321 + $0x740] sm:$0xff]
        %v609 = vld [vmem:[%s321 + $0x748] sm:$0xff]
        %v610 = vld [vmem:[%s321 + $0x750] sm:$0xff]
        %v611 = vld [vmem:[%s321 + $0x758] sm:$0xff]
        %v612 = vld [vmem:[%s321 + $0x760] sm:$0xff]
        %v613 = vld [vmem:[%s321 + $0x768] sm:$0xff]
        %v614 = vld [vmem:[%s321 + $0x770] sm:$0xff]
        %v615 = vld [vmem:[%s321 + $0x778] sm:$0xff]
        %v616 = vld [vmem:[%s321 + $0x780] sm:$0xff]
        %v617 = vld [vmem:[%s321 + $0x788] sm:$0xff]
        %v618 = vld [vmem:[%s321 + $0x790] sm:$0xff]
        %v619 = vld [vmem:[%s321 + $0x798] sm:$0xff]
        %v620 = vld [vmem:[%s321 + $0x7a0] sm:$0xff]
        %v621 = vld [vmem:[%s321 + $0x7a8] sm:$0xff]
        %v622 = vld [vmem:[%s321 + $0x7b0] sm:$0xff]
        %v623 = vld [vmem:[%s321 + $0x7b8] sm:$0xff]
        %v624 = vld [vmem:[%s321 + $0x7c0] sm:$0xff]
        %v625 = vld [vmem:[%s321 + $0x7c8] sm:$0xff]
        %v626 = vld [vmem:[%s321 + $0x7d0] sm:$0xff]
        %v627 = vld [vmem:[%s321 + $0x7d8] sm:$0xff]
        %v628 = vld [vmem:[%s321 + $0x7e0] sm:$0xff]
        %v629 = vld [vmem:[%s321 + $0x7e8] sm:$0xff]
        %v630 = vld [vmem:[%s321 + $0x7f0] sm:$0xff]
        %v631 = vld [vmem:[%s321 + $0x7f8] sm:$0xff]
        %632 = vmatpush.msra.mxu0 %v391
        %633 = vmatpush.msra.mxu0 %v390
        %634 = vmatpush.msra.mxu0 %v389
        %635 = vmatpush.msra.mxu0 %v388
        %636 = vmatpush.msra.mxu0 %v387
        %637 = vmatpush.msra.mxu0 %v386
        %638 = vmatpush.msra.mxu0 %v385
        %639 = vmatpush.msra.mxu0 %v384
        %640 = vmatpush.msra.mxu0 %v383
        %641 = vmatpush.msra.mxu0 %v382
        %642 = vmatpush.msra.mxu0 %v381
        %643 = vmatpush.msra.mxu0 %v380
        %644 = vmatpush.msra.mxu0 %v379
        %645 = vmatpush.msra.mxu0 %v378
        %646 = vmatpush.msra.mxu0 %v377
        %647 = vmatpush.msra.mxu0 %v376
        %648 = vmatmul.f32.gmra.mxu0 %v344
        %v649 = vpop.f32.mrf.mxu0
        %v650 = vadd.f32 0.0, %v649
        %651 = vmatmul.f32.gmra.mxu0 %v360
        %v652 = vpop.f32.mrf.mxu0
        %v653 = vadd.f32 0.0, %v652
        %654 = vdwg.mxu0
        %655 = vmatpush.msra.mxu0 %v407
        %656 = vmatpush.msra.mxu0 %v406
        %657 = vmatpush.msra.mxu0 %v405
        %658 = vmatpush.msra.mxu0 %v404
        %659 = vmatpush.msra.mxu0 %v403
        %660 = vmatpush.msra.mxu0 %v402
        %661 = vmatpush.msra.mxu0 %v401
        %662 = vmatpush.msra.mxu0 %v400
        %663 = vmatpush.msra.mxu0 %v399
        %664 = vmatpush.msra.mxu0 %v398
        %665 = vmatpush.msra.mxu0 %v397
        %666 = vmatpush.msra.mxu0 %v396
        %667 = vmatpush.msra.mxu0 %v395
        %668 = vmatpush.msra.mxu0 %v394
        %669 = vmatpush.msra.mxu0 %v393
        %670 = vmatpush.msra.mxu0 %v392
        %671 = vmatmul.f32.gmra.mxu0 %v345
        %v672 = vpop.f32.mrf.mxu0
        %v673 = vadd.f32 %v650, %v672
        %674 = vmatmul.f32.gmra.mxu0 %v361
        %v675 = vpop.f32.mrf.mxu0
        %v676 = vadd.f32 %v653, %v675
        %677 = vdwg.mxu0
        %678 = vmatpush.msra.mxu0 %v423
        %679 = vmatpush.msra.mxu0 %v422
        %680 = vmatpush.msra.mxu0 %v421
        %681 = vmatpush.msra.mxu0 %v420
        %682 = vmatpush.msra.mxu0 %v419
        %683 = vmatpush.msra.mxu0 %v418
        %684 = vmatpush.msra.mxu0 %v417
        %685 = vmatpush.msra.mxu0 %v416
        %686 = vmatpush.msra.mxu0 %v415
        %687 = vmatpush.msra.mxu0 %v414
        %688 = vmatpush.msra.mxu0 %v413
        %689 = vmatpush.msra.mxu0 %v412
        %690 = vmatpush.msra.mxu0 %v411
        %691 = vmatpush.msra.mxu0 %v410
        %692 = vmatpush.msra.mxu0 %v409
        %693 = vmatpush.msra.mxu0 %v408
        %694 = vmatmul.f32.gmra.mxu0 %v346
        %v695 = vpop.f32.mrf.mxu0
        %v696 = vadd.f32 %v673, %v695
        %697 = vmatmul.f32.gmra.mxu0 %v362
        %v698 = vpop.f32.mrf.mxu0
        %v699 = vadd.f32 %v676, %v698
        %700 = vdwg.mxu0
        %701 = vmatpush.msra.mxu0 %v439
        %702 = vmatpush.msra.mxu0 %v438
        %703 = vmatpush.msra.mxu0 %v437
        %704 = vmatpush.msra.mxu0 %v436
        %705 = vmatpush.msra.mxu0 %v435
        %706 = vmatpush.msra.mxu0 %v434
        %707 = vmatpush.msra.mxu0 %v433
        %708 = vmatpush.msra.mxu0 %v432
        %709 = vmatpush.msra.mxu0 %v431
        %710 = vmatpush.msra.mxu0 %v430
        %711 = vmatpush.msra.mxu0 %v429
        %712 = vmatpush.msra.mxu0 %v428
        %713 = vmatpush.msra.mxu0 %v427
        %714 = vmatpush.msra.mxu0 %v426
        %715 = vmatpush.msra.mxu0 %v425
        %716 = vmatpush.msra.mxu0 %v424
        %717 = vmatmul.f32.gmra.mxu0 %v347
        %v718 = vpop.f32.mrf.mxu0
        %v719 = vadd.f32 %v696, %v718
        %720 = vmatmul.f32.gmra.mxu0 %v363
        %v721 = vpop.f32.mrf.mxu0
        %v722 = vadd.f32 %v699, %v721
        %723 = vdwg.mxu0
        %724 = vmatpush.msra.mxu0 %v455
        %725 = vmatpush.msra.mxu0 %v454
        %726 = vmatpush.msra.mxu0 %v453
        %727 = vmatpush.msra.mxu0 %v452
        %728 = vmatpush.msra.mxu0 %v451
        %729 = vmatpush.msra.mxu0 %v450
        %730 = vmatpush.msra.mxu0 %v449
        %731 = vmatpush.msra.mxu0 %v448
        %732 = vmatpush.msra.mxu0 %v447
        %733 = vmatpush.msra.mxu0 %v446
        %734 = vmatpush.msra.mxu0 %v445
        %735 = vmatpush.msra.mxu0 %v444
        %736 = vmatpush.msra.mxu0 %v443
        %737 = vmatpush.msra.mxu0 %v442
        %738 = vmatpush.msra.mxu0 %v441
        %739 = vmatpush.msra.mxu0 %v440
        %740 = vmatmul.f32.gmra.mxu0 %v348
        %v741 = vpop.f32.mrf.mxu0
        %v742 = vadd.f32 %v719, %v741
        %743 = vmatmul.f32.gmra.mxu0 %v364
        %v744 = vpop.f32.mrf.mxu0
        %v745 = vadd.f32 %v722, %v744
        %746 = vdwg.mxu0
        %747 = vmatpush.msra.mxu0 %v471
        %748 = vmatpush.msra.mxu0 %v470
        %749 = vmatpush.msra.mxu0 %v469
        %750 = vmatpush.msra.mxu0 %v468
        %751 = vmatpush.msra.mxu0 %v467
        %752 = vmatpush.msra.mxu0 %v466
        %753 = vmatpush.msra.mxu0 %v465
        %754 = vmatpush.msra.mxu0 %v464
        %755 = vmatpush.msra.mxu0 %v463
        %756 = vmatpush.msra.mxu0 %v462
        %757 = vmatpush.msra.mxu0 %v461
        %758 = vmatpush.msra.mxu0 %v460
        %759 = vmatpush.msra.mxu0 %v459
        %760 = vmatpush.msra.mxu0 %v458
        %761 = vmatpush.msra.mxu0 %v457
        %762 = vmatpush.msra.mxu0 %v456
        %763 = vmatmul.f32.gmra.mxu0 %v349
        %v764 = vpop.f32.mrf.mxu0
        %v765 = vadd.f32 %v742, %v764
        %766 = vmatmul.f32.gmra.mxu0 %v365
        %v767 = vpop.f32.mrf.mxu0
        %v768 = vadd.f32 %v745, %v767
        %769 = vdwg.mxu0
        %770 = vmatpush.msra.mxu0 %v487
        %771 = vmatpush.msra.mxu0 %v486
        %772 = vmatpush.msra.mxu0 %v485
        %773 = vmatpush.msra.mxu0 %v484
        %774 = vmatpush.msra.mxu0 %v483
        %775 = vmatpush.msra.mxu0 %v482
        %776 = vmatpush.msra.mxu0 %v481
        %777 = vmatpush.msra.mxu0 %v480
        %778 = vmatpush.msra.mxu0 %v479
        %779 = vmatpush.msra.mxu0 %v478
        %780 = vmatpush.msra.mxu0 %v477
        %781 = vmatpush.msra.mxu0 %v476
        %782 = vmatpush.msra.mxu0 %v475
        %783 = vmatpush.msra.mxu0 %v474
        %784 = vmatpush.msra.mxu0 %v473
        %785 = vmatpush.msra.mxu0 %v472
        %786 = vmatmul.f32.gmra.mxu0 %v350
        %v787 = vpop.f32.mrf.mxu0
        %v788 = vadd.f32 %v765, %v787
        %789 = vmatmul.f32.gmra.mxu0 %v366
        %v790 = vpop.f32.mrf.mxu0
        %v791 = vadd.f32 %v768, %v790
        %792 = vdwg.mxu0
        %793 = vmatpush.msra.mxu0 %v503
        %794 = vmatpush.msra.mxu0 %v502
        %795 = vmatpush.msra.mxu0 %v501
        %796 = vmatpush.msra.mxu0 %v500
        %797 = vmatpush.msra.mxu0 %v499
        %798 = vmatpush.msra.mxu0 %v498
        %799 = vmatpush.msra.mxu0 %v497
        %800 = vmatpush.msra.mxu0 %v496
        %801 = vmatpush.msra.mxu0 %v495
        %802 = vmatpush.msra.mxu0 %v494
        %803 = vmatpush.msra.mxu0 %v493
        %804 = vmatpush.msra.mxu0 %v492
        %805 = vmatpush.msra.mxu0 %v491
        %806 = vmatpush.msra.mxu0 %v490
        %807 = vmatpush.msra.mxu0 %v489
        %808 = vmatpush.msra.mxu0 %v488
        %809 = vmatmul.f32.gmra.mxu0 %v351
        %v810 = vpop.f32.mrf.mxu0
        %v811 = vadd.f32 %v788, %v810
        %812 = vmatmul.f32.gmra.mxu0 %v367
        %v813 = vpop.f32.mrf.mxu0
        %v814 = vadd.f32 %v791, %v813
        %815 = vdwg.mxu0
        %816 = vmatpush.msra.mxu0 %v519
        %817 = vmatpush.msra.mxu0 %v518
        %818 = vmatpush.msra.mxu0 %v517
        %819 = vmatpush.msra.mxu0 %v516
        %820 = vmatpush.msra.mxu0 %v515
        %821 = vmatpush.msra.mxu0 %v514
        %822 = vmatpush.msra.mxu0 %v513
        %823 = vmatpush.msra.mxu0 %v512
        %824 = vmatpush.msra.mxu0 %v511
        %825 = vmatpush.msra.mxu0 %v510
        %826 = vmatpush.msra.mxu0 %v509
        %827 = vmatpush.msra.mxu0 %v508
        %828 = vmatpush.msra.mxu0 %v507
        %829 = vmatpush.msra.mxu0 %v506
        %830 = vmatpush.msra.mxu0 %v505
        %831 = vmatpush.msra.mxu0 %v504
        %832 = vmatmul.f32.gmra.mxu0 %v352
        %v833 = vpop.f32.mrf.mxu0
        %v834 = vadd.f32 %v811, %v833
        %835 = vmatmul.f32.gmra.mxu0 %v368
        %v836 = vpop.f32.mrf.mxu0
        %v837 = vadd.f32 %v814, %v836
        %838 = vdwg.mxu0
        %839 = vmatpush.msra.mxu0 %v535
        %840 = vmatpush.msra.mxu0 %v534
        %841 = vmatpush.msra.mxu0 %v533
        %842 = vmatpush.msra.mxu0 %v532
        %843 = vmatpush.msra.mxu0 %v531
        %844 = vmatpush.msra.mxu0 %v530
        %845 = vmatpush.msra.mxu0 %v529
        %846 = vmatpush.msra.mxu0 %v528
        %847 = vmatpush.msra.mxu0 %v527
        %848 = vmatpush.msra.mxu0 %v526
        %849 = vmatpush.msra.mxu0 %v525
        %850 = vmatpush.msra.mxu0 %v524
        %851 = vmatpush.msra.mxu0 %v523
        %852 = vmatpush.msra.mxu0 %v522
        %853 = vmatpush.msra.mxu0 %v521
        %854 = vmatpush.msra.mxu0 %v520
        %855 = vmatmul.f32.gmra.mxu0 %v353
        %v856 = vpop.f32.mrf.mxu0
        %v857 = vadd.f32 %v834, %v856
        %858 = vmatmul.f32.gmra.mxu0 %v369
        %v859 = vpop.f32.mrf.mxu0
        %v860 = vadd.f32 %v837, %v859
        %861 = vdwg.mxu0
        %862 = vmatpush.msra.mxu0 %v551
        %863 = vmatpush.msra.mxu0 %v550
        %864 = vmatpush.msra.mxu0 %v549
        %865 = vmatpush.msra.mxu0 %v548
        %866 = vmatpush.msra.mxu0 %v547
        %867 = vmatpush.msra.mxu0 %v546
        %868 = vmatpush.msra.mxu0 %v545
        %869 = vmatpush.msra.mxu0 %v544
        %870 = vmatpush.msra.mxu0 %v543
        %871 = vmatpush.msra.mxu0 %v542
        %872 = vmatpush.msra.mxu0 %v541
        %873 = vmatpush.msra.mxu0 %v540
        %874 = vmatpush.msra.mxu0 %v539
        %875 = vmatpush.msra.mxu0 %v538
        %876 = vmatpush.msra.mxu0 %v537
        %877 = vmatpush.msra.mxu0 %v536
        %878 = vmatmul.f32.gmra.mxu0 %v354
        %v879 = vpop.f32.mrf.mxu0
        %v880 = vadd.f32 %v857, %v879
        %881 = vmatmul.f32.gmra.mxu0 %v370
        %v882 = vpop.f32.mrf.mxu0
        %v883 = vadd.f32 %v860, %v882
        %884 = vdwg.mxu0
        %885 = vmatpush.msra.mxu0 %v567
        %886 = vmatpush.msra.mxu0 %v566
        %887 = vmatpush.msra.mxu0 %v565
        %888 = vmatpush.msra.mxu0 %v564
        %889 = vmatpush.msra.mxu0 %v563
        %890 = vmatpush.msra.mxu0 %v562
        %891 = vmatpush.msra.mxu0 %v561
        %892 = vmatpush.msra.mxu0 %v560
        %893 = vmatpush.msra.mxu0 %v559
        %894 = vmatpush.msra.mxu0 %v558
        %895 = vmatpush.msra.mxu0 %v557
        %896 = vmatpush.msra.mxu0 %v556
        %897 = vmatpush.msra.mxu0 %v555
        %898 = vmatpush.msra.mxu0 %v554
        %899 = vmatpush.msra.mxu0 %v553
        %900 = vmatpush.msra.mxu0 %v552
        %901 = vmatmul.f32.gmra.mxu0 %v355
        %v902 = vpop.f32.mrf.mxu0
        %v903 = vadd.f32 %v880, %v902
        %904 = vmatmul.f32.gmra.mxu0 %v371
        %v905 = vpop.f32.mrf.mxu0
        %v906 = vadd.f32 %v883, %v905
        %907 = vdwg.mxu0
        %908 = vmatpush.msra.mxu0 %v583
        %909 = vmatpush.msra.mxu0 %v582
        %910 = vmatpush.msra.mxu0 %v581
        %911 = vmatpush.msra.mxu0 %v580
        %912 = vmatpush.msra.mxu0 %v579
        %913 = vmatpush.msra.mxu0 %v578
        %914 = vmatpush.msra.mxu0 %v577
        %915 = vmatpush.msra.mxu0 %v576
        %916 = vmatpush.msra.mxu0 %v575
        %917 = vmatpush.msra.mxu0 %v574
        %918 = vmatpush.msra.mxu0 %v573
        %919 = vmatpush.msra.mxu0 %v572
        %920 = vmatpush.msra.mxu0 %v571
        %921 = vmatpush.msra.mxu0 %v570
        %922 = vmatpush.msra.mxu0 %v569
        %923 = vmatpush.msra.mxu0 %v568
        %924 = vmatmul.f32.gmra.mxu0 %v356
        %v925 = vpop.f32.mrf.mxu0
        %v926 = vadd.f32 %v903, %v925
        %927 = vmatmul.f32.gmra.mxu0 %v372
        %v928 = vpop.f32.mrf.mxu0
        %v929 = vadd.f32 %v906, %v928
        %930 = vdwg.mxu0
        %931 = vmatpush.msra.mxu0 %v599
        %932 = vmatpush.msra.mxu0 %v598
        %933 = vmatpush.msra.mxu0 %v597
        %934 = vmatpush.msra.mxu0 %v596
        %935 = vmatpush.msra.mxu0 %v595
        %936 = vmatpush.msra.mxu0 %v594
        %937 = vmatpush.msra.mxu0 %v593
        %938 = vmatpush.msra.mxu0 %v592
        %939 = vmatpush.msra.mxu0 %v591
        %940 = vmatpush.msra.mxu0 %v590
        %941 = vmatpush.msra.mxu0 %v589
        %942 = vmatpush.msra.mxu0 %v588
        %943 = vmatpush.msra.mxu0 %v587
        %944 = vmatpush.msra.mxu0 %v586
        %945 = vmatpush.msra.mxu0 %v585
        %946 = vmatpush.msra.mxu0 %v584
        %947 = vmatmul.f32.gmra.mxu0 %v357
        %v948 = vpop.f32.mrf.mxu0
        %v949 = vadd.f32 %v926, %v948
        %950 = vmatmul.f32.gmra.mxu0 %v373
        %v951 = vpop.f32.mrf.mxu0
        %v952 = vadd.f32 %v929, %v951
        %953 = vdwg.mxu0
        %954 = vmatpush.msra.mxu0 %v615
        %955 = vmatpush.msra.mxu0 %v614
        %956 = vmatpush.msra.mxu0 %v613
        %957 = vmatpush.msra.mxu0 %v612
        %958 = vmatpush.msra.mxu0 %v611
        %959 = vmatpush.msra.mxu0 %v610
        %960 = vmatpush.msra.mxu0 %v609
        %961 = vmatpush.msra.mxu0 %v608
        %962 = vmatpush.msra.mxu0 %v607
        %963 = vmatpush.msra.mxu0 %v606
        %964 = vmatpush.msra.mxu0 %v605
        %965 = vmatpush.msra.mxu0 %v604
        %966 = vmatpush.msra.mxu0 %v603
        %967 = vmatpush.msra.mxu0 %v602
        %968 = vmatpush.msra.mxu0 %v601
        %969 = vmatpush.msra.mxu0 %v600
        %970 = vmatmul.f32.gmra.mxu0 %v358
        %v971 = vpop.f32.mrf.mxu0
        %v972 = vadd.f32 %v949, %v971
        %973 = vmatmul.f32.gmra.mxu0 %v374
        %v974 = vpop.f32.mrf.mxu0
        %v975 = vadd.f32 %v952, %v974
        %976 = vdwg.mxu0
        %977 = vmatpush.msra.mxu0 %v631
        %978 = vmatpush.msra.mxu0 %v630
        %979 = vmatpush.msra.mxu0 %v629
        %980 = vmatpush.msra.mxu0 %v628
        %981 = vmatpush.msra.mxu0 %v627
        %982 = vmatpush.msra.mxu0 %v626
        %983 = vmatpush.msra.mxu0 %v625
        %984 = vmatpush.msra.mxu0 %v624
        %985 = vmatpush.msra.mxu0 %v623
        %986 = vmatpush.msra.mxu0 %v622
        %987 = vmatpush.msra.mxu0 %v621
        %988 = vmatpush.msra.mxu0 %v620
        %989 = vmatpush.msra.mxu0 %v619
        %990 = vmatpush.msra.mxu0 %v618
        %991 = vmatpush.msra.mxu0 %v617
        %992 = vmatpush.msra.mxu0 %v616
        %993 = vmatmul.f32.gmra.mxu0 %v359
        %v994 = vpop.f32.mrf.mxu0
        %v995 = vadd.f32 %v972, %v994
        %996 = vmatmul.f32.gmra.mxu0 %v375
        %v997 = vpop.f32.mrf.mxu0
        %v998 = vadd.f32 %v975, %v997
        %999 = vdwg.mxu0
        %v1000 = vadd.f32 %v342, %v995
        %v1001 = vadd.f32 %v343, %v998
        %vm1002 = vcmask 523264
        %1003 = vst.msk [vmem:[#allocation2] sm:$0xff] %vm1002, %v1000
        %1004 = vst.msk [vmem:[#allocation2 + $0x8] sm:$0xff] %vm1002, %v1001
        %p1005 = scmp.eq.s32.totalorder %s21, 11
        // Predicated region
        $region60: #{model_forward.3} parent=50 // pred_check
          %p1006 = pneg %p1005
        $region61: #{model_forward.3} parent=50 // pred_check_branch
          %1008 = sbr.rel (%p1006) target = $region63
        $region62: #{model_forward.3} parent=50 // pred_region
          %v1009 = vld [vmem:[#allocation2] sm:$0xff]
          %v1010 = vld [vmem:[#allocation2 + $0x8] sm:$0xff]
          %v1011 = vld [vmem:[%s325] sm:$0x1]
          %v1013 = vperm.slane %v1011, 0
          %v1015 = vadd.f32 %v1009, %v1013
          %v1016 = vadd.f32 %v1010, %v1013
          %v1017 = vmax.f32 %v1015, 0.0
          %v1018 = vmax.f32 %v1016, 0.0
          %1019 = vst.msk [vmem:[%s333] sm:$0xff] %vm1002, %v1017
          %1020 = vst.msk [vmem:[%s333 + $0x8] sm:$0xff] %vm1002, %v1018
        $region63: #{model_forward.3} parent=50 // pred_fallthru
          _
        %s1021 = smul.u32 2, %s19
        %p1022 = scmp.lt.s32.totalorder %s1021, 1
        %s1023 = scalar_select %p1022, %s1021, 1
        %p1024 = scmp.lt.s32.totalorder %s20, 0
        %s1025 = scalar_select %p1024, %s20, 0
        %s1026 = sadd.s32 %s1025, %s1023
        %s1027 = smul.addr %s1026, 8
        %s1028 = scalar_lea.vmem %s3, %s1027
        // Predicated region
        $region64: #{model_forward.3} parent=50 // pred_check
          %p1029 = pneg %p135
        $region65: #{model_forward.3} parent=50 // pred_check_branch
          %1031 = sbr.rel (%p1029) target = $region67
        $region66: #{model_forward.3} parent=50 // pred_region
          %s1032 = smul.u32 2, %s19
        $region67: #{model_forward.3} parent=50 // pred_fallthru
          _
        // Predicated region
        $region68: #{model_forward.3} parent=50 // pred_check
          %p1033 = pneg %p135
        $region69: #{model_forward.3} parent=50 // pred_check_branch
          %1035 = sbr.rel (%p1033) target = $region71
        $region70: #{model_forward.3} parent=50 // pred_region
          %s1036 = smul.u32 2, %s19
          %p1037 = scmp.lt.s32.totalorder %s1036, 1
          %s1038 = scalar_select %p1037, %s1036, 1
          %p1039 = scmp.lt.s32.totalorder %s20, 0
          %s1040 = scalar_select %p1039, %s20, 0
          %s1041 = sadd.s32 %s1040, %s1038
          %s1042 = smul.addr %s1041, 8
          %s1043 = scalar_lea.vmem %s3, %s1042
        $region71: #{model_forward.3} parent=50 // pred_fallthru
          _
      $region51: #{model_forward.3} parent=5 // pred_fallthru
        _
      %p1044 = scmp.le.s32.totalorder 2, %s9
      // Predicated region
      $region72: #{model_forward.3} parent=5 // pred_check
        %p1045 = pneg %p1044
      $region73: #{model_forward.3} parent=5 // pred_check_branch
        %1047 = sbr.rel (%p1045) target = $region75
      $region74: #{model_forward.3} parent=5 // pred_region
        %s1048 = ssub.s32 %s9, 2
      $region75: #{model_forward.3} parent=5 // pred_fallthru
        _
    $region6: #{model_forward.3} parent=1 // loop_footer
      %s13 = sadd.s32 1, %s9
    $region7: #{model_forward.3} parent=1 // loop_footer_branch
      %8 = sbr.rel target = $region3
    $region8: #{model_forward.3} parent=1 // loop_exit
      _

// kernel: model_forward.4
$region0: #{model_forward.4}
  #allocation0 [shape = 'u32[]', space=smem, size = 0x4, offset = 0x4, fixed_abs, tag = 'smem constant byte address 0x4 - core index']
  #allocation1 [shape = 'u32[72,128]{1,0:T(1,128)}', space=vmem, size = 0x9000, scoped, tag = 'internal scratch']
  #allocation2 [shape = 'f32[16,1408]{1,0:T(8,128)}', space=vmem, size = 0x16000, scoped, tag = 'scratch operand']
  %s0 = inlined_call_operand.vmem [shape: f32[16,64], index: 0, kind: input, shape index: {}]
  %s1 = inlined_call_operand.vmem [shape: f32[64,1408], index: 1, kind: input, shape index: {}]
  %s2 = inlined_call_operand.vmem [shape: f32[1,1408], index: 2, kind: input, shape index: {}]
  %s3 = inlined_call_operand.vmem [shape: f32[16,1408], index: 3, kind: output, shape index: {}]
  %s4 = sld [smem:[#allocation0]]
  $region30: #{model_forward.4} parent=0
    _
  %s6 = ssub.s32 1, %s4
  %s7 = scalar_select 0, %s6, %s4
  // Predicated region
  $region2: #{model_forward.4} parent=0 // pred_check
    _
  $region3: #{model_forward.4} parent=0 // pred_check_branch
    %9 = sbr.rel (0) target = $region5
  $region4: #{model_forward.4} parent=0 // pred_region
    _
  $region5: #{model_forward.4} parent=0 // pred_fallthru
    _
  // Predicated region
  $region6: #{model_forward.4} parent=0 // pred_check
    _
  $region7: #{model_forward.4} parent=0 // pred_check_branch
    %11 = sbr.rel (0) target = $region9
  $region8: #{model_forward.4} parent=0 // pred_region
    _
  $region9: #{model_forward.4} parent=0 // pred_fallthru
    _
  // Predicated region
  $region10: #{model_forward.4} parent=0 // pred_check
    _
  $region11: #{model_forward.4} parent=0 // pred_check_branch
    %13 = sbr.rel (0) target = $region13
  $region12: #{model_forward.4} parent=0 // pred_region
    _
  $region13: #{model_forward.4} parent=0 // pred_fallthru
    _
  %p14 = scmp.eq.s32.totalorder 0, 0
  // Predicated region
  $region14: #{model_forward.4} parent=0 // pred_check
    %p15 = pneg %p14
  $region15: #{model_forward.4} parent=0 // pred_check_branch
    %17 = sbr.rel (%p15) target = $region17
  $region16: #{model_forward.4} parent=0 // pred_region
    %18 = vst [vmem:[#allocation2] sm:$0xff] 0.0
    %19 = vst [vmem:[#allocation2 + $0x8] sm:$0xff] 0.0
    %20 = vst [vmem:[#allocation2 + $0x10] sm:$0xff] 0.0
    %21 = vst [vmem:[#allocation2 + $0x18] sm:$0xff] 0.0
    %22 = vst [vmem:[#allocation2 + $0x20] sm:$0xff] 0.0
    %23 = vst [vmem:[#allocation2 + $0x28] sm:$0xff] 0.0
    %24 = vst [vmem:[#allocation2 + $0x30] sm:$0xff] 0.0
    %25 = vst [vmem:[#allocation2 + $0x38] sm:$0xff] 0.0
    %26 = vst [vmem:[#allocation2 + $0x40] sm:$0xff] 0.0
    %27 = vst [vmem:[#allocation2 + $0x48] sm:$0xff] 0.0
    %28 = vst [vmem:[#allocation2 + $0x50] sm:$0xff] 0.0
    %29 = vst [vmem:[#allocation2 + $0x58] sm:$0xff] 0.0
    %30 = vst [vmem:[#allocation2 + $0x60] sm:$0xff] 0.0
    %31 = vst [vmem:[#allocation2 + $0x68] sm:$0xff] 0.0
    %32 = vst [vmem:[#allocation2 + $0x70] sm:$0xff] 0.0
    %33 = vst [vmem:[#allocation2 + $0x78] sm:$0xff] 0.0
    %34 = vst [vmem:[#allocation2 + $0x80] sm:$0xff] 0.0
    %35 = vst [vmem:[#allocation2 + $0x88] sm:$0xff] 0.0
    %36 = vst [vmem:[#allocation2 + $0x90] sm:$0xff] 0.0
    %37 = vst [vmem:[#allocation2 + $0x98] sm:$0xff] 0.0
    %38 = vst [vmem:[#allocation2 + $0xa0] sm:$0xff] 0.0
    %39 = vst [vmem:[#allocation2 + $0xa8] sm:$0xff] 0.0
  $region17: #{model_forward.4} parent=0 // pred_fallthru
    _
  %v40 = vld [vmem:[#allocation2] sm:$0xff]
  %v41 = vld [vmem:[#allocation2 + $0x8] sm:$0xff]
  %v42 = vld [vmem:[#allocation2 + $0x10] sm:$0xff]
  %v43 = vld [vmem:[#allocation2 + $0x18] sm:$0xff]
  %v44 = vld [vmem:[#allocation2 + $0x20] sm:$0xff]
  %v45 = vld [vmem:[#allocation2 + $0x28] sm:$0xff]
  %v46 = vld [vmem:[#allocation2 + $0x30] sm:$0xff]
  %v47 = vld [vmem:[#allocation2 + $0x38] sm:$0xff]
  %v48 = vld [vmem:[#allocation2 + $0x40] sm:$0xff]
  %v49 = vld [vmem:[#allocation2 + $0x48] sm:$0xff]
  %v50 = vld [vmem:[#allocation2 + $0x50] sm:$0xff]
  %v51 = vld [vmem:[#allocation2 + $0x58] sm:$0xff]
  %v52 = vld [vmem:[#allocation2 + $0x60] sm:$0xff]
  %v53 = vld [vmem:[#allocation2 + $0x68] sm:$0xff]
  %v54 = vld [vmem:[#allocation2 + $0x70] sm:$0xff]
  %v55 = vld [vmem:[#allocation2 + $0x78] sm:$0xff]
  %v56 = vld [vmem:[#allocation2 + $0x80] sm:$0xff]
  %v57 = vld [vmem:[#allocation2 + $0x88] sm:$0xff]
  %v58 = vld [vmem:[#allocation2 + $0x90] sm:$0xff]
  %v59 = vld [vmem:[#allocation2 + $0x98] sm:$0xff]
  %v60 = vld [vmem:[#allocation2 + $0xa0] sm:$0xff]
  %v61 = vld [vmem:[#allocation2 + $0xa8] sm:$0xff]
  %v62 = vld [vmem:[%s0] sm:$0xff]
  %v63 = vld [vmem:[%s0 + $0x8] sm:$0xff]
  %v64 = vld [vmem:[%s1] sm:$0xff]
  %v65 = vld [vmem:[%s1 + $0x8] sm:$0xff]
  %v66 = vld [vmem:[%s1 + $0x10] sm:$0xff]
  %v67 = vld [vmem:[%s1 + $0x18] sm:$0xff]
  %v68 = vld [vmem:[%s1 + $0x20] sm:$0xff]
  %v69 = vld [vmem:[%s1 + $0x28] sm:$0xff]
  %v70 = vld [vmem:[%s1 + $0x30] sm:$0xff]
  %v71 = vld [vmem:[%s1 + $0x38] sm:$0xff]
  %v72 = vld [vmem:[%s1 + $0x40] sm:$0xff]
  %v73 = vld [vmem:[%s1 + $0x48] sm:$0xff]
  %v74 = vld [vmem:[%s1 + $0x50] sm:$0xff]
  %v75 = vld [vmem:[%s1 + $0x58] sm:$0xff]
  %v76 = vld [vmem:[%s1 + $0x60] sm:$0xff]
  %v77 = vld [vmem:[%s1 + $0x68] sm:$0xff]
  %v78 = vld [vmem:[%s1 + $0x70] sm:$0xff]
  %v79 = vld [vmem:[%s1 + $0x78] sm:$0xff]
  %v80 = vld [vmem:[%s1 + $0x80] sm:$0xff]
  %v81 = vld [vmem:[%s1 + $0x88] sm:$0xff]
  %v82 = vld [vmem:[%s1 + $0x90] sm:$0xff]
  %v83 = vld [vmem:[%s1 + $0x98] sm:$0xff]
  %v84 = vld [vmem:[%s1 + $0xa0] sm:$0xff]
  %v85 = vld [vmem:[%s1 + $0xa8] sm:$0xff]
  %v86 = vld [vmem:[%s1 + $0xb0] sm:$0xff]
  %v87 = vld [vmem:[%s1 + $0xb8] sm:$0xff]
  %v88 = vld [vmem:[%s1 + $0xc0] sm:$0xff]
  %v89 = vld [vmem:[%s1 + $0xc8] sm:$0xff]
  %v90 = vld [vmem:[%s1 + $0xd0] sm:$0xff]
  %v91 = vld [vmem:[%s1 + $0xd8] sm:$0xff]
  %v92 = vld [vmem:[%s1 + $0xe0] sm:$0xff]
  %v93 = vld [vmem:[%s1 + $0xe8] sm:$0xff]
  %v94 = vld [vmem:[%s1 + $0xf0] sm:$0xff]
  %v95 = vld [vmem:[%s1 + $0xf8] sm:$0xff]
  %v96 = vld [vmem:[%s1 + $0x100] sm:$0xff]
  %v97 = vld [vmem:[%s1 + $0x108] sm:$0xff]
  %v98 = vld [vmem:[%s1 + $0x110] sm:$0xff]
  %v99 = vld [vmem:[%s1 + $0x118] sm:$0xff]
  %v100 = vld [vmem:[%s1 + $0x120] sm:$0xff]
  %v101 = vld [vmem:[%s1 + $0x128] sm:$0xff]
  %v102 = vld [vmem:[%s1 + $0x130] sm:$0xff]
  %v103 = vld [vmem:[%s1 + $0x138] sm:$0xff]
  %v104 = vld [vmem:[%s1 + $0x140] sm:$0xff]
  %v105 = vld [vmem:[%s1 + $0x148] sm:$0xff]
  %v106 = vld [vmem:[%s1 + $0x150] sm:$0xff]
  %v107 = vld [vmem:[%s1 + $0x158] sm:$0xff]
  %v108 = vld [vmem:[%s1 + $0x160] sm:$0xff]
  %v109 = vld [vmem:[%s1 + $0x168] sm:$0xff]
  %v110 = vld [vmem:[%s1 + $0x170] sm:$0xff]
  %v111 = vld [vmem:[%s1 + $0x178] sm:$0xff]
  %v112 = vld [vmem:[%s1 + $0x180] sm:$0xff]
  %v113 = vld [vmem:[%s1 + $0x188] sm:$0xff]
  %v114 = vld [vmem:[%s1 + $0x190] sm:$0xff]
  %v115 = vld [vmem:[%s1 + $0x198] sm:$0xff]
  %v116 = vld [vmem:[%s1 + $0x1a0] sm:$0xff]
  %v117 = vld [vmem:[%s1 + $0x1a8] sm:$0xff]
  %v118 = vld [vmem:[%s1 + $0x1b0] sm:$0xff]
  %v119 = vld [vmem:[%s1 + $0x1b8] sm:$0xff]
  %v120 = vld [vmem:[%s1 + $0x1c0] sm:$0xff]
  %v121 = vld [vmem:[%s1 + $0x1c8] sm:$0xff]
  %v122 = vld [vmem:[%s1 + $0x1d0] sm:$0xff]
  %v123 = vld [vmem:[%s1 + $0x1d8] sm:$0xff]
  %v124 = vld [vmem:[%s1 + $0x1e0] sm:$0xff]
  %v125 = vld [vmem:[%s1 + $0x1e8] sm:$0xff]
  %v126 = vld [vmem:[%s1 + $0x1f0] sm:$0xff]
  %v127 = vld [vmem:[%s1 + $0x1f8] sm:$0xff]
  %v128 = vld [vmem:[%s1 + $0x200] sm:$0xff]
  %v129 = vld [vmem:[%s1 + $0x208] sm:$0xff]
  %v130 = vld [vmem:[%s1 + $0x210] sm:$0xff]
  %v131 = vld [vmem:[%s1 + $0x218] sm:$0xff]
  %v132 = vld [vmem:[%s1 + $0x220] sm:$0xff]
  %v133 = vld [vmem:[%s1 + $0x228] sm:$0xff]
  %v134 = vld [vmem:[%s1 + $0x230] sm:$0xff]
  %v135 = vld [vmem:[%s1 + $0x238] sm:$0xff]
  %v136 = vld [vmem:[%s1 + $0x240] sm:$0xff]
  %v137 = vld [vmem:[%s1 + $0x248] sm:$0xff]
  %v138 = vld [vmem:[%s1 + $0x250] sm:$0xff]
  %v139 = vld [vmem:[%s1 + $0x258] sm:$0xff]
  %v140 = vld [vmem:[%s1 + $0x260] sm:$0xff]
  %v141 = vld [vmem:[%s1 + $0x268] sm:$0xff]
  %v142 = vld [vmem:[%s1 + $0x270] sm:$0xff]
  %v143 = vld [vmem:[%s1 + $0x278] sm:$0xff]
  %v144 = vld [vmem:[%s1 + $0x280] sm:$0xff]
  %v145 = vld [vmem:[%s1 + $0x288] sm:$0xff]
  %v146 = vld [vmem:[%s1 + $0x290] sm:$0xff]
  %v147 = vld [vmem:[%s1 + $0x298] sm:$0xff]
  %v148 = vld [vmem:[%s1 + $0x2a0] sm:$0xff]
  %v149 = vld [vmem:[%s1 + $0x2a8] sm:$0xff]
  %v150 = vld [vmem:[%s1 + $0x2b0] sm:$0xff]
  %v151 = vld [vmem:[%s1 + $0x2b8] sm:$0xff]
  %vm152 = vcmask 523264
  %v154 = vsel %vm152, %v62, 0
  %v157 = vsel %vm152, %v63, 0
  %159 = vmatpush.msra.mxu0 0.0
  %160 = vmatpush.msra.mxu0 0.0
  %161 = vmatpush.msra.mxu0 0.0
  %162 = vmatpush.msra.mxu0 0.0
  %163 = vmatpush.msra.mxu0 0.0
  %164 = vmatpush.msra.mxu0 0.0
  %165 = vmatpush.msra.mxu0 0.0
  %166 = vmatpush.msra.mxu0 0.0
  %167 = vmatpush.msra.mxu0 %v141
  %168 = vmatpush.msra.mxu0 %v130
  %169 = vmatpush.msra.mxu0 %v119
  %170 = vmatpush.msra.mxu0 %v108
  %171 = vmatpush.msra.mxu0 %v97
  %172 = vmatpush.msra.mxu0 %v86
  %173 = vmatpush.msra.mxu0 %v75
  %174 = vmatpush.msra.mxu0 %v64
  %175 = vmatmul.f32.gmra.mxu0 %v154
  %v176 = vpop.f32.mrf.mxu0
  %v177 = vadd.f32 0.0, %v176
  %178 = vmatmul.f32.gmra.mxu0 %v157
  %v179 = vpop.f32.mrf.mxu0
  %v180 = vadd.f32 0.0, %v179
  %181 = vdwg.mxu0
  %182 = vmatpush.msra.mxu0 0.0
  %183 = vmatpush.msra.mxu0 0.0
  %184 = vmatpush.msra.mxu0 0.0
  %185 = vmatpush.msra.mxu0 0.0
  %186 = vmatpush.msra.mxu0 0.0
  %187 = vmatpush.msra.mxu0 0.0
  %188 = vmatpush.msra.mxu0 0.0
  %189 = vmatpush.msra.mxu0 0.0
  %190 = vmatpush.msra.mxu0 %v142
  %191 = vmatpush.msra.mxu0 %v131
  %192 = vmatpush.msra.mxu0 %v120
  %193 = vmatpush.msra.mxu0 %v109
  %194 = vmatpush.msra.mxu0 %v98
  %195 = vmatpush.msra.mxu0 %v87
  %196 = vmatpush.msra.mxu0 %v76
  %197 = vmatpush.msra.mxu0 %v65
  %198 = vmatmul.f32.gmra.mxu0 %v154
  %v199 = vpop.f32.mrf.mxu0
  %v200 = vadd.f32 0.0, %v199
  %201 = vmatmul.f32.gmra.mxu0 %v157
  %v202 = vpop.f32.mrf.mxu0
  %v203 = vadd.f32 0.0, %v202
  %204 = vdwg.mxu0
  %205 = vmatpush.msra.mxu0 0.0
  %206 = vmatpush.msra.mxu0 0.0
  %207 = vmatpush.msra.mxu0 0.0
  %208 = vmatpush.msra.mxu0 0.0
  %209 = vmatpush.msra.mxu0 0.0
  %210 = vmatpush.msra.mxu0 0.0
  %211 = vmatpush.msra.mxu0 0.0
  %212 = vmatpush.msra.mxu0 0.0
  %213 = vmatpush.msra.mxu0 %v143
  %214 = vmatpush.msra.mxu0 %v132
  %215 = vmatpush.msra.mxu0 %v121
  %216 = vmatpush.msra.mxu0 %v110
  %217 = vmatpush.msra.mxu0 %v99
  %218 = vmatpush.msra.mxu0 %v88
  %219 = vmatpush.msra.mxu0 %v77
  %220 = vmatpush.msra.mxu0 %v66
  %221 = vmatmul.f32.gmra.mxu0 %v154
  %v222 = vpop.f32.mrf.mxu0
  %v223 = vadd.f32 0.0, %v222
  %224 = vmatmul.f32.gmra.mxu0 %v157
  %v225 = vpop.f32.mrf.mxu0
  %v226 = vadd.f32 0.0, %v225
  %227 = vdwg.mxu0
  %228 = vmatpush.msra.mxu0 0.0
  %229 = vmatpush.msra.mxu0 0.0
  %230 = vmatpush.msra.mxu0 0.0
  %231 = vmatpush.msra.mxu0 0.0
  %232 = vmatpush.msra.mxu0 0.0
  %233 = vmatpush.msra.mxu0 0.0
  %234 = vmatpush.msra.mxu0 0.0
  %235 = vmatpush.msra.mxu0 0.0
  %236 = vmatpush.msra.mxu0 %v144
  %237 = vmatpush.msra.mxu0 %v133
  %238 = vmatpush.msra.mxu0 %v122
  %239 = vmatpush.msra.mxu0 %v111
  %240 = vmatpush.msra.mxu0 %v100
  %241 = vmatpush.msra.mxu0 %v89
  %242 = vmatpush.msra.mxu0 %v78
  %243 = vmatpush.msra.mxu0 %v67
  %244 = vmatmul.f32.gmra.mxu0 %v154
  %v245 = vpop.f32.mrf.mxu0
  %v246 = vadd.f32 0.0, %v245
  %247 = vmatmul.f32.gmra.mxu0 %v157
  %v248 = vpop.f32.mrf.mxu0
  %v249 = vadd.f32 0.0, %v248
  %250 = vdwg.mxu0
  %251 = vmatpush.msra.mxu0 0.0
  %252 = vmatpush.msra.mxu0 0.0
  %253 = vmatpush.msra.mxu0 0.0
  %254 = vmatpush.msra.mxu0 0.0
  %255 = vmatpush.msra.mxu0 0.0
  %256 = vmatpush.msra.mxu0 0.0
  %257 = vmatpush.msra.mxu0 0.0
  %258 = vmatpush.msra.mxu0 0.0
  %259 = vmatpush.msra.mxu0 %v145
  %260 = vmatpush.msra.mxu0 %v134
  %261 = vmatpush.msra.mxu0 %v123
  %262 = vmatpush.msra.mxu0 %v112
  %263 = vmatpush.msra.mxu0 %v101
  %264 = vmatpush.msra.mxu0 %v90
  %265 = vmatpush.msra.mxu0 %v79
  %266 = vmatpush.msra.mxu0 %v68
  %267 = vmatmul.f32.gmra.mxu0 %v154
  %v268 = vpop.f32.mrf.mxu0
  %v269 = vadd.f32 0.0, %v268
  %270 = vmatmul.f32.gmra.mxu0 %v157
  %v271 = vpop.f32.mrf.mxu0
  %v272 = vadd.f32 0.0, %v271
  %273 = vdwg.mxu0
  %274 = vmatpush.msra.mxu0 0.0
  %275 = vmatpush.msra.mxu0 0.0
  %276 = vmatpush.msra.mxu0 0.0
  %277 = vmatpush.msra.mxu0 0.0
  %278 = vmatpush.msra.mxu0 0.0
  %279 = vmatpush.msra.mxu0 0.0
  %280 = vmatpush.msra.mxu0 0.0
  %281 = vmatpush.msra.mxu0 0.0
  %282 = vmatpush.msra.mxu0 %v146
  %283 = vmatpush.msra.mxu0 %v135
  %284 = vmatpush.msra.mxu0 %v124
  %285 = vmatpush.msra.mxu0 %v113
  %286 = vmatpush.msra.mxu0 %v102
  %287 = vmatpush.msra.mxu0 %v91
  %288 = vmatpush.msra.mxu0 %v80
  %289 = vmatpush.msra.mxu0 %v69
  %290 = vmatmul.f32.gmra.mxu0 %v154
  %v291 = vpop.f32.mrf.mxu0
  %v292 = vadd.f32 0.0, %v291
  %293 = vmatmul.f32.gmra.mxu0 %v157
  %v294 = vpop.f32.mrf.mxu0
  %v295 = vadd.f32 0.0, %v294
  %296 = vdwg.mxu0
  %297 = vmatpush.msra.mxu0 0.0
  %298 = vmatpush.msra.mxu0 0.0
  %299 = vmatpush.msra.mxu0 0.0
  %300 = vmatpush.msra.mxu0 0.0
  %301 = vmatpush.msra.mxu0 0.0
  %302 = vmatpush.msra.mxu0 0.0
  %303 = vmatpush.msra.mxu0 0.0
  %304 = vmatpush.msra.mxu0 0.0
  %305 = vmatpush.msra.mxu0 %v147
  %306 = vmatpush.msra.mxu0 %v136
  %307 = vmatpush.msra.mxu0 %v125
  %308 = vmatpush.msra.mxu0 %v114
  %309 = vmatpush.msra.mxu0 %v103
  %310 = vmatpush.msra.mxu0 %v92
  %311 = vmatpush.msra.mxu0 %v81
  %312 = vmatpush.msra.mxu0 %v70
  %313 = vmatmul.f32.gmra.mxu0 %v154
  %v314 = vpop.f32.mrf.mxu0
  %v315 = vadd.f32 0.0, %v314
  %316 = vmatmul.f32.gmra.mxu0 %v157
  %v317 = vpop.f32.mrf.mxu0
  %v318 = vadd.f32 0.0, %v317
  %319 = vdwg.mxu0
  %320 = vmatpush.msra.mxu0 0.0
  %321 = vmatpush.msra.mxu0 0.0
  %322 = vmatpush.msra.mxu0 0.0
  %323 = vmatpush.msra.mxu0 0.0
  %324 = vmatpush.msra.mxu0 0.0
  %325 = vmatpush.msra.mxu0 0.0
  %326 = vmatpush.msra.mxu0 0.0
  %327 = vmatpush.msra.mxu0 0.0
  %328 = vmatpush.msra.mxu0 %v148
  %329 = vmatpush.msra.mxu0 %v137
  %330 = vmatpush.msra.mxu0 %v126
  %331 = vmatpush.msra.mxu0 %v115
  %332 = vmatpush.msra.mxu0 %v104
  %333 = vmatpush.msra.mxu0 %v93
  %334 = vmatpush.msra.mxu0 %v82
  %335 = vmatpush.msra.mxu0 %v71
  %336 = vmatmul.f32.gmra.mxu0 %v154
  %v337 = vpop.f32.mrf.mxu0
  %v338 = vadd.f32 0.0, %v337
  %339 = vmatmul.f32.gmra.mxu0 %v157
  %v340 = vpop.f32.mrf.mxu0
  %v341 = vadd.f32 0.0, %v340
  %342 = vdwg.mxu0
  %343 = vmatpush.msra.mxu0 0.0
  %344 = vmatpush.msra.mxu0 0.0
  %345 = vmatpush.msra.mxu0 0.0
  %346 = vmatpush.msra.mxu0 0.0
  %347 = vmatpush.msra.mxu0 0.0
  %348 = vmatpush.msra.mxu0 0.0
  %349 = vmatpush.msra.mxu0 0.0
  %350 = vmatpush.msra.mxu0 0.0
  %351 = vmatpush.msra.mxu0 %v149
  %352 = vmatpush.msra.mxu0 %v138
  %353 = vmatpush.msra.mxu0 %v127
  %354 = vmatpush.msra.mxu0 %v116
  %355 = vmatpush.msra.mxu0 %v105
  %356 = vmatpush.msra.mxu0 %v94
  %357 = vmatpush.msra.mxu0 %v83
  %358 = vmatpush.msra.mxu0 %v72
  %359 = vmatmul.f32.gmra.mxu0 %v154
  %v360 = vpop.f32.mrf.mxu0
  %v361 = vadd.f32 0.0, %v360
  %362 = vmatmul.f32.gmra.mxu0 %v157
  %v363 = vpop.f32.mrf.mxu0
  %v364 = vadd.f32 0.0, %v363
  %365 = vdwg.mxu0
  %366 = vmatpush.msra.mxu0 0.0
  %367 = vmatpush.msra.mxu0 0.0
  %368 = vmatpush.msra.mxu0 0.0
  %369 = vmatpush.msra.mxu0 0.0
  %370 = vmatpush.msra.mxu0 0.0
  %371 = vmatpush.msra.mxu0 0.0
  %372 = vmatpush.msra.mxu0 0.0
  %373 = vmatpush.msra.mxu0 0.0
  %374 = vmatpush.msra.mxu0 %v150
  %375 = vmatpush.msra.mxu0 %v139
  %376 = vmatpush.msra.mxu0 %v128
  %377 = vmatpush.msra.mxu0 %v117
  %378 = vmatpush.msra.mxu0 %v106
  %379 = vmatpush.msra.mxu0 %v95
  %380 = vmatpush.msra.mxu0 %v84
  %381 = vmatpush.msra.mxu0 %v73
  %382 = vmatmul.f32.gmra.mxu0 %v154
  %v383 = vpop.f32.mrf.mxu0
  %v384 = vadd.f32 0.0, %v383
  %385 = vmatmul.f32.gmra.mxu0 %v157
  %v386 = vpop.f32.mrf.mxu0
  %v387 = vadd.f32 0.0, %v386
  %388 = vdwg.mxu0
  %389 = vmatpush.msra.mxu0 0.0
  %390 = vmatpush.msra.mxu0 0.0
  %391 = vmatpush.msra.mxu0 0.0
  %392 = vmatpush.msra.mxu0 0.0
  %393 = vmatpush.msra.mxu0 0.0
  %394 = vmatpush.msra.mxu0 0.0
  %395 = vmatpush.msra.mxu0 0.0
  %396 = vmatpush.msra.mxu0 0.0
  %397 = vmatpush.msra.mxu0 %v151
  %398 = vmatpush.msra.mxu0 %v140
  %399 = vmatpush.msra.mxu0 %v129
  %400 = vmatpush.msra.mxu0 %v118
  %401 = vmatpush.msra.mxu0 %v107
  %402 = vmatpush.msra.mxu0 %v96
  %403 = vmatpush.msra.mxu0 %v85
  %404 = vmatpush.msra.mxu0 %v74
  %405 = vmatmul.f32.gmra.mxu0 %v154
  %v406 = vpop.f32.mrf.mxu0
  %v407 = vadd.f32 0.0, %v406
  %408 = vmatmul.f32.gmra.mxu0 %v157
  %v409 = vpop.f32.mrf.mxu0
  %v410 = vadd.f32 0.0, %v409
  %411 = vdwg.mxu0
  %v412 = vadd.f32 %v40, %v177
  %v413 = vadd.f32 %v41, %v200
  %v414 = vadd.f32 %v42, %v223
  %v415 = vadd.f32 %v43, %v246
  %v416 = vadd.f32 %v44, %v269
  %v417 = vadd.f32 %v45, %v292
  %v418 = vadd.f32 %v46, %v315
  %v419 = vadd.f32 %v47, %v338
  %v420 = vadd.f32 %v48, %v361
  %v421 = vadd.f32 %v49, %v384
  %v422 = vadd.f32 %v50, %v407
  %v423 = vadd.f32 %v51, %v180
  %v424 = vadd.f32 %v52, %v203
  %v425 = vadd.f32 %v53, %v226
  %v426 = vadd.f32 %v54, %v249
  %v427 = vadd.f32 %v55, %v272
  %v428 = vadd.f32 %v56, %v295
  %v429 = vadd.f32 %v57, %v318
  %v430 = vadd.f32 %v58, %v341
  %v431 = vadd.f32 %v59, %v364
  %v432 = vadd.f32 %v60, %v387
  %v433 = vadd.f32 %v61, %v410
  %434 = vst [vmem:[#allocation2] sm:$0xff] %v412
  %435 = vst [vmem:[#allocation2 + $0x8] sm:$0xff] %v413
  %436 = vst [vmem:[#allocation2 + $0x10] sm:$0xff] %v414
  %437 = vst [vmem:[#allocation2 + $0x18] sm:$0xff] %v415
  %438 = vst [vmem:[#allocation2 + $0x20] sm:$0xff] %v416
  %439 = vst [vmem:[#allocation2 + $0x28] sm:$0xff] %v417
  %440 = vst [vmem:[#allocation2 + $0x30] sm:$0xff] %v418
  %441 = vst [vmem:[#allocation2 + $0x38] sm:$0xff] %v419
  %442 = vst [vmem:[#allocation2 + $0x40] sm:$0xff] %v420
  %443 = vst [vmem:[#allocation2 + $0x48] sm:$0xff] %v421
  %444 = vst [vmem:[#allocation2 + $0x50] sm:$0xff] %v422
  %445 = vst [vmem:[#allocation2 + $0x58] sm:$0xff] %v423
  %446 = vst [vmem:[#allocation2 + $0x60] sm:$0xff] %v424
  %447 = vst [vmem:[#allocation2 + $0x68] sm:$0xff] %v425
  %448 = vst [vmem:[#allocation2 + $0x70] sm:$0xff] %v426
  %449 = vst [vmem:[#allocation2 + $0x78] sm:$0xff] %v427
  %450 = vst [vmem:[#allocation2 + $0x80] sm:$0xff] %v428
  %451 = vst [vmem:[#allocation2 + $0x88] sm:$0xff] %v429
  %452 = vst [vmem:[#allocation2 + $0x90] sm:$0xff] %v430
  %453 = vst [vmem:[#allocation2 + $0x98] sm:$0xff] %v431
  %454 = vst [vmem:[#allocation2 + $0xa0] sm:$0xff] %v432
  %455 = vst [vmem:[#allocation2 + $0xa8] sm:$0xff] %v433
  // Predicated region
  $region18: #{model_forward.4} parent=0 // pred_check
    %p456 = pneg %p14
  $region19: #{model_forward.4} parent=0 // pred_check_branch
    %458 = sbr.rel (%p456) target = $region21
  $region20: #{model_forward.4} parent=0 // pred_region
    %v459 = vld [vmem:[#allocation2] sm:$0xff]
    %v460 = vld [vmem:[#allocation2 + $0x8] sm:$0xff]
    %v461 = vld [vmem:[#allocation2 + $0x10] sm:$0xff]
    %v462 = vld [vmem:[#allocation2 + $0x18] sm:$0xff]
    %v463 = vld [vmem:[#allocation2 + $0x20] sm:$0xff]
    %v464 = vld [vmem:[#allocation2 + $0x28] sm:$0xff]
    %v465 = vld [vmem:[#allocation2 + $0x30] sm:$0xff]
    %v466 = vld [vmem:[#allocation2 + $0x38] sm:$0xff]
    %v467 = vld [vmem:[#allocation2 + $0x40] sm:$0xff]
    %v468 = vld [vmem:[#allocation2 + $0x48] sm:$0xff]
    %v469 = vld [vmem:[#allocation2 + $0x50] sm:$0xff]
    %v470 = vld [vmem:[#allocation2 + $0x58] sm:$0xff]
    %v471 = vld [vmem:[#allocation2 + $0x60] sm:$0xff]
    %v472 = vld [vmem:[#allocation2 + $0x68] sm:$0xff]
    %v473 = vld [vmem:[#allocation2 + $0x70] sm:$0xff]
    %v474 = vld [vmem:[#allocation2 + $0x78] sm:$0xff]
    %v475 = vld [vmem:[#allocation2 + $0x80] sm:$0xff]
    %v476 = vld [vmem:[#allocation2 + $0x88] sm:$0xff]
    %v477 = vld [vmem:[#allocation2 + $0x90] sm:$0xff]
    %v478 = vld [vmem:[#allocation2 + $0x98] sm:$0xff]
    %v479 = vld [vmem:[#allocation2 + $0xa0] sm:$0xff]
    %v480 = vld [vmem:[#allocation2 + $0xa8] sm:$0xff]
    %v481 = vld [vmem:[%s2] sm:$0xff]
    %v482 = vld [vmem:[%s2 + $0x8] sm:$0x7]
    %v485 = vperm.slane %v481, 0
    %v486 = vperm.slane %v481, 1
    %v487 = vperm.slane %v481, 2
    %v488 = vperm.slane %v481, 3
    %v489 = vperm.slane %v481, 4
    %v490 = vperm.slane %v481, 5
    %v491 = vperm.slane %v481, 6
    %v492 = vperm.slane %v481, 7
    %v493 = vperm.slane %v482, 0
    %v494 = vperm.slane %v482, 1
    %v495 = vperm.slane %v482, 2
    %v507 = vadd.f32 %v459, %v485
    %v508 = vadd.f32 %v460, %v486
    %v509 = vadd.f32 %v461, %v487
    %v510 = vadd.f32 %v462, %v488
    %v511 = vadd.f32 %v463, %v489
    %v512 = vadd.f32 %v464, %v490
    %v513 = vadd.f32 %v465, %v491
    %v514 = vadd.f32 %v466, %v492
    %v515 = vadd.f32 %v467, %v493
    %v516 = vadd.f32 %v468, %v494
    %v517 = vadd.f32 %v469, %v495
    %v518 = vadd.f32 %v470, %v485
    %v519 = vadd.f32 %v471, %v486
    %v520 = vadd.f32 %v472, %v487
    %v521 = vadd.f32 %v473, %v488
    %v522 = vadd.f32 %v474, %v489
    %v523 = vadd.f32 %v475, %v490
    %v524 = vadd.f32 %v476, %v491
    %v525 = vadd.f32 %v477, %v492
    %v526 = vadd.f32 %v478, %v493
    %v527 = vadd.f32 %v479, %v494
    %v528 = vadd.f32 %v480, %v495
    %529 = vst [vmem:[%s3] sm:$0xff] %v507
    %530 = vst [vmem:[%s3 + $0x8] sm:$0xff] %v508
    %531 = vst [vmem:[%s3 + $0x10] sm:$0xff] %v509
    %532 = vst [vmem:[%s3 + $0x18] sm:$0xff] %v510
    %533 = vst [vmem:[%s3 + $0x20] sm:$0xff] %v511
    %534 = vst [vmem:[%s3 + $0x28] sm:$0xff] %v512
    %535 = vst [vmem:[%s3 + $0x30] sm:$0xff] %v513
    %536 = vst [vmem:[%s3 + $0x38] sm:$0xff] %v514
    %537 = vst [vmem:[%s3 + $0x40] sm:$0xff] %v515
    %538 = vst [vmem:[%s3 + $0x48] sm:$0xff] %v516
    %539 = vst [vmem:[%s3 + $0x50] sm:$0xff] %v517
    %540 = vst [vmem:[%s3 + $0x58] sm:$0xff] %v518
    %541 = vst [vmem:[%s3 + $0x60] sm:$0xff] %v519
    %542 = vst [vmem:[%s3 + $0x68] sm:$0xff] %v520
    %543 = vst [vmem:[%s3 + $0x70] sm:$0xff] %v521
    %544 = vst [vmem:[%s3 + $0x78] sm:$0xff] %v522
    %545 = vst [vmem:[%s3 + $0x80] sm:$0xff] %v523
    %546 = vst [vmem:[%s3 + $0x88] sm:$0xff] %v524
    %547 = vst [vmem:[%s3 + $0x90] sm:$0xff] %v525
    %548 = vst [vmem:[%s3 + $0x98] sm:$0xff] %v526
    %549 = vst [vmem:[%s3 + $0xa0] sm:$0xff] %v527
    %550 = vst [vmem:[%s3 + $0xa8] sm:$0xff] %v528
  $region21: #{model_forward.4} parent=0 // pred_fallthru
    _
  // Predicated region
  $region22: #{model_forward.4} parent=0 // pred_check
    _
  $region23: #{model_forward.4} parent=0 // pred_check_branch
    %552 = sbr.rel (0) target = $region25
  $region24: #{model_forward.4} parent=0 // pred_region
    _
  $region25: #{model_forward.4} parent=0 // pred_fallthru
    _
  // Predicated region
  $region26: #{model_forward.4} parent=0 // pred_check
    _
  $region27: #{model_forward.4} parent=0 // pred_check_branch
    %554 = sbr.rel (0) target = $region29
  $region28: #{model_forward.4} parent=0 // pred_region
    _
  $region29: #{model_forward.4} parent=0 // pred_fallthru
    _

// kernel: model_forward.5
$region0: #{model_forward.5}
  #allocation0 [shape = 'u32[]', space=smem, size = 0x4, offset = 0x4, fixed_abs, tag = 'smem constant byte address 0x4 - core index']
  #allocation1 [shape = 'u32[72,128]{1,0:T(1,128)}', space=vmem, size = 0x9000, scoped, tag = 'internal scratch']
  %s0 = inlined_call_operand.vmem [shape: f32[14,2500], index: 0, kind: input, shape index: {}]
  %s1 = inlined_call_operand.vmem [shape: f32[14,2500], index: 1, kind: input, shape index: {}]
  %s2 = inlined_call_operand.vmem [shape: f32[14,1], index: 2, kind: input, shape index: {}]
  %s3 = inlined_call_operand.vmem [shape: f32[14,2500], index: 3, kind: output, shape index: {}]
  %s4 = sld [smem:[#allocation0]]
  $region22: #{model_forward.5} parent=0
    _
  %s6 = ssub.s32 1, %s4
  %s7 = scalar_select 0, %s6, %s4
  // Predicated region
  $region2: #{model_forward.5} parent=0 // pred_check
    _
  $region3: #{model_forward.5} parent=0 // pred_check_branch
    %9 = sbr.rel (0) target = $region5
  $region4: #{model_forward.5} parent=0 // pred_region
    _
  $region5: #{model_forward.5} parent=0 // pred_fallthru
    _
  // Predicated region
  $region6: #{model_forward.5} parent=0 // pred_check
    _
  $region7: #{model_forward.5} parent=0 // pred_check_branch
    %11 = sbr.rel (0) target = $region9
  $region8: #{model_forward.5} parent=0 // pred_region
    _
  $region9: #{model_forward.5} parent=0 // pred_fallthru
    _
  // Predicated region
  $region10: #{model_forward.5} parent=0 // pred_check
    _
  $region11: #{model_forward.5} parent=0 // pred_check_branch
    %13 = sbr.rel (0) target = $region13
  $region12: #{model_forward.5} parent=0 // pred_region
    _
  $region13: #{model_forward.5} parent=0 // pred_fallthru
    _
  %v14 = vld [vmem:[%s0] sm:$0xff]
  %v15 = vld [vmem:[%s0 + $0x8] sm:$0xff]
  %v16 = vld [vmem:[%s0 + $0x10] sm:$0xff]
  %v17 = vld [vmem:[%s0 + $0x18] sm:$0xff]
  %v18 = vld [vmem:[%s0 + $0x20] sm:$0xff]
  %v19 = vld [vmem:[%s0 + $0x28] sm:$0xff]
  %v20 = vld [vmem:[%s0 + $0x30] sm:$0xff]
  %v21 = vld [vmem:[%s0 + $0x38] sm:$0xff]
  %v22 = vld [vmem:[%s0 + $0x40] sm:$0xff]
  %v23 = vld [vmem:[%s0 + $0x48] sm:$0xff]
  %v24 = vld [vmem:[%s0 + $0x50] sm:$0xff]
  %v25 = vld [vmem:[%s0 + $0x58] sm:$0xff]
  %v26 = vld [vmem:[%s0 + $0x60] sm:$0xff]
  %v27 = vld [vmem:[%s0 + $0x68] sm:$0xff]
  %v28 = vld [vmem:[%s0 + $0x70] sm:$0xff]
  %v29 = vld [vmem:[%s0 + $0x78] sm:$0xff]
  %v30 = vld [vmem:[%s0 + $0x80] sm:$0xff]
  %v31 = vld [vmem:[%s0 + $0x88] sm:$0xff]
  %v32 = vld [vmem:[%s0 + $0x90] sm:$0xff]
  %v33 = vld [vmem:[%s0 + $0x98] sm:$0xff]
  %v34 = vld [vmem:[%s0 + $0xa0] sm:$0x3f]
  %v35 = vld [vmem:[%s0 + $0xa8] sm:$0x3f]
  %v36 = vld [vmem:[%s0 + $0xb0] sm:$0x3f]
  %v37 = vld [vmem:[%s0 + $0xb8] sm:$0x3f]
  %v38 = vld [vmem:[%s0 + $0xc0] sm:$0x3f]
  %v39 = vld [vmem:[%s0 + $0xc8] sm:$0x3f]
  %v40 = vld [vmem:[%s0 + $0xd0] sm:$0x3f]
  %v41 = vld [vmem:[%s0 + $0xd8] sm:$0x3f]
  %v42 = vld [vmem:[%s0 + $0xe0] sm:$0x3f]
  %v43 = vld [vmem:[%s0 + $0xe8] sm:$0x3f]
  %v44 = vld [vmem:[%s0 + $0xf0] sm:$0x3f]
  %v45 = vld [vmem:[%s0 + $0xf8] sm:$0x3f]
  %v46 = vld [vmem:[%s0 + $0x100] sm:$0x3f]
  %v47 = vld [vmem:[%s0 + $0x108] sm:$0x3f]
  %v48 = vld [vmem:[%s0 + $0x110] sm:$0x3f]
  %v49 = vld [vmem:[%s0 + $0x118] sm:$0x3f]
  %v50 = vld [vmem:[%s0 + $0x120] sm:$0x3f]
  %v51 = vld [vmem:[%s0 + $0x128] sm:$0x3f]
  %v52 = vld [vmem:[%s0 + $0x130] sm:$0x3f]
  %v53 = vld [vmem:[%s0 + $0x138] sm:$0x3f]
  %v54 = vld [vmem:[%s1] sm:$0xff]
  %v55 = vld [vmem:[%s1 + $0x8] sm:$0xff]
  %v56 = vld [vmem:[%s1 + $0x10] sm:$0xff]
  %v57 = vld [vmem:[%s1 + $0x18] sm:$0xff]
  %v58 = vld [vmem:[%s1 + $0x20] sm:$0xff]
  %v59 = vld [vmem:[%s1 + $0x28] sm:$0xff]
  %v60 = vld [vmem:[%s1 + $0x30] sm:$0xff]
  %v61 = vld [vmem:[%s1 + $0x38] sm:$0xff]
  %v62 = vld [vmem:[%s1 + $0x40] sm:$0xff]
  %v63 = vld [vmem:[%s1 + $0x48] sm:$0xff]
  %v64 = vld [vmem:[%s1 + $0x50] sm:$0xff]
  %v65 = vld [vmem:[%s1 + $0x58] sm:$0xff]
  %v66 = vld [vmem:[%s1 + $0x60] sm:$0xff]
  %v67 = vld [vmem:[%s1 + $0x68] sm:$0xff]
  %v68 = vld [vmem:[%s1 + $0x70] sm:$0xff]
  %v69 = vld [vmem:[%s1 + $0x78] sm:$0xff]
  %v70 = vld [vmem:[%s1 + $0x80] sm:$0xff]
  %v71 = vld [vmem:[%s1 + $0x88] sm:$0xff]
  %v72 = vld [vmem:[%s1 + $0x90] sm:$0xff]
  %v73 = vld [vmem:[%s1 + $0x98] sm:$0xff]
  %v74 = vld [vmem:[%s1 + $0xa0] sm:$0x3f]
  %v75 = vld [vmem:[%s1 + $0xa8] sm:$0x3f]
  %v76 = vld [vmem:[%s1 + $0xb0] sm:$0x3f]
  %v77 = vld [vmem:[%s1 + $0xb8] sm:$0x3f]
  %v78 = vld [vmem:[%s1 + $0xc0] sm:$0x3f]
  %v79 = vld [vmem:[%s1 + $0xc8] sm:$0x3f]
  %v80 = vld [vmem:[%s1 + $0xd0] sm:$0x3f]
  %v81 = vld [vmem:[%s1 + $0xd8] sm:$0x3f]
  %v82 = vld [vmem:[%s1 + $0xe0] sm:$0x3f]
  %v83 = vld [vmem:[%s1 + $0xe8] sm:$0x3f]
  %v84 = vld [vmem:[%s1 + $0xf0] sm:$0x3f]
  %v85 = vld [vmem:[%s1 + $0xf8] sm:$0x3f]
  %v86 = vld [vmem:[%s1 + $0x100] sm:$0x3f]
  %v87 = vld [vmem:[%s1 + $0x108] sm:$0x3f]
  %v88 = vld [vmem:[%s1 + $0x110] sm:$0x3f]
  %v89 = vld [vmem:[%s1 + $0x118] sm:$0x3f]
  %v90 = vld [vmem:[%s1 + $0x120] sm:$0x3f]
  %v91 = vld [vmem:[%s1 + $0x128] sm:$0x3f]
  %v92 = vld [vmem:[%s1 + $0x130] sm:$0x3f]
  %v93 = vld [vmem:[%s1 + $0x138] sm:$0x3f]
  %v94 = vadd.f32 %v14, %v54
  %v95 = vadd.f32 %v15, %v55
  %v96 = vadd.f32 %v16, %v56
  %v97 = vadd.f32 %v17, %v57
  %v98 = vadd.f32 %v18, %v58
  %v99 = vadd.f32 %v19, %v59
  %v100 = vadd.f32 %v20, %v60
  %v101 = vadd.f32 %v21, %v61
  %v102 = vadd.f32 %v22, %v62
  %v103 = vadd.f32 %v23, %v63
  %v104 = vadd.f32 %v24, %v64
  %v105 = vadd.f32 %v25, %v65
  %v106 = vadd.f32 %v26, %v66
  %v107 = vadd.f32 %v27, %v67
  %v108 = vadd.f32 %v28, %v68
  %v109 = vadd.f32 %v29, %v69
  %v110 = vadd.f32 %v30, %v70
  %v111 = vadd.f32 %v31, %v71
  %v112 = vadd.f32 %v32, %v72
  %v113 = vadd.f32 %v33, %v73
  %v114 = vadd.f32 %v34, %v74
  %v115 = vadd.f32 %v35, %v75
  %v116 = vadd.f32 %v36, %v76
  %v117 = vadd.f32 %v37, %v77
  %v118 = vadd.f32 %v38, %v78
  %v119 = vadd.f32 %v39, %v79
  %v120 = vadd.f32 %v40, %v80
  %v121 = vadd.f32 %v41, %v81
  %v122 = vadd.f32 %v42, %v82
  %v123 = vadd.f32 %v43, %v83
  %v124 = vadd.f32 %v44, %v84
  %v125 = vadd.f32 %v45, %v85
  %v126 = vadd.f32 %v46, %v86
  %v127 = vadd.f32 %v47, %v87
  %v128 = vadd.f32 %v48, %v88
  %v129 = vadd.f32 %v49, %v89
  %v130 = vadd.f32 %v50, %v90
  %v131 = vadd.f32 %v51, %v91
  %v132 = vadd.f32 %v52, %v92
  %v133 = vadd.f32 %v53, %v93
  %v134 = vld [vmem:[%s2] sm:$0xff]
  %v135 = vld [vmem:[%s2 + $0x8] sm:$0x3f]
  %137 = vset.pattern.permute.xlu0 0
  %138 = vperm.xlu0 %137, %v134
  %v139 = vpop.permute.xlu0 %138
  %142 = vset.pattern.permute.xlu0 0
  %143 = vperm.xlu0 %142, %v135
  %v144 = vpop.permute.xlu0 %143
  %v146 = vadd.f32 %v94, %v139
  %v147 = vadd.f32 %v95, %v139
  %v148 = vadd.f32 %v96, %v139
  %v149 = vadd.f32 %v97, %v139
  %v150 = vadd.f32 %v98, %v139
  %v151 = vadd.f32 %v99, %v139
  %v152 = vadd.f32 %v100, %v139
  %v153 = vadd.f32 %v101, %v139
  %v154 = vadd.f32 %v102, %v139
  %v155 = vadd.f32 %v103, %v139
  %v156 = vadd.f32 %v104, %v139
  %v157 = vadd.f32 %v105, %v139
  %v158 = vadd.f32 %v106, %v139
  %v159 = vadd.f32 %v107, %v139
  %v160 = vadd.f32 %v108, %v139
  %v161 = vadd.f32 %v109, %v139
  %v162 = vadd.f32 %v110, %v139
  %v163 = vadd.f32 %v111, %v139
  %v164 = vadd.f32 %v112, %v139
  %v165 = vadd.f32 %v113, %v139
  %v166 = vadd.f32 %v114, %v144
  %v167 = vadd.f32 %v115, %v144
  %v168 = vadd.f32 %v116, %v144
  %v169 = vadd.f32 %v117, %v144
  %v170 = vadd.f32 %v118, %v144
  %v171 = vadd.f32 %v119, %v144
  %v172 = vadd.f32 %v120, %v144
  %v173 = vadd.f32 %v121, %v144
  %v174 = vadd.f32 %v122, %v144
  %v175 = vadd.f32 %v123, %v144
  %v176 = vadd.f32 %v124, %v144
  %v177 = vadd.f32 %v125, %v144
  %v178 = vadd.f32 %v126, %v144
  %v179 = vadd.f32 %v127, %v144
  %v180 = vadd.f32 %v128, %v144
  %v181 = vadd.f32 %v129, %v144
  %v182 = vadd.f32 %v130, %v144
  %v183 = vadd.f32 %v131, %v144
  %v184 = vadd.f32 %v132, %v144
  %v185 = vadd.f32 %v133, %v144
  %v186 = vtanh.pop %v146
  %v187 = vtanh.pop %v147
  %v188 = vtanh.pop %v148
  %v189 = vtanh.pop %v149
  %v190 = vtanh.pop %v150
  %v191 = vtanh.pop %v151
  %v192 = vtanh.pop %v152
  %v193 = vtanh.pop %v153
  %v194 = vtanh.pop %v154
  %v195 = vtanh.pop %v155
  %v196 = vtanh.pop %v156
  %v197 = vtanh.pop %v157
  %v198 = vtanh.pop %v158
  %v199 = vtanh.pop %v159
  %v200 = vtanh.pop %v160
  %v201 = vtanh.pop %v161
  %v202 = vtanh.pop %v162
  %v203 = vtanh.pop %v163
  %v204 = vtanh.pop %v164
  %v205 = vtanh.pop %v165
  %v206 = vtanh.pop %v166
  %v207 = vtanh.pop %v167
  %v208 = vtanh.pop %v168
  %v209 = vtanh.pop %v169
  %v210 = vtanh.pop %v170
  %v211 = vtanh.pop %v171
  %v212 = vtanh.pop %v172
  %v213 = vtanh.pop %v173
  %v214 = vtanh.pop %v174
  %v215 = vtanh.pop %v175
  %v216 = vtanh.pop %v176
  %v217 = vtanh.pop %v177
  %v218 = vtanh.pop %v178
  %v219 = vtanh.pop %v179
  %v220 = vtanh.pop %v180
  %v221 = vtanh.pop %v181
  %v222 = vtanh.pop %v182
  %v223 = vtanh.pop %v183
  %v224 = vtanh.pop %v184
  %v225 = vtanh.pop %v185
  %226 = vst [vmem:[%s3] sm:$0xff] %v186
  %227 = vst [vmem:[%s3 + $0x8] sm:$0xff] %v187
  %228 = vst [vmem:[%s3 + $0x10] sm:$0xff] %v188
  %229 = vst [vmem:[%s3 + $0x18] sm:$0xff] %v189
  %230 = vst [vmem:[%s3 + $0x20] sm:$0xff] %v190
  %231 = vst [vmem:[%s3 + $0x28] sm:$0xff] %v191
  %232 = vst [vmem:[%s3 + $0x30] sm:$0xff] %v192
  %233 = vst [vmem:[%s3 + $0x38] sm:$0xff] %v193
  %234 = vst [vmem:[%s3 + $0x40] sm:$0xff] %v194
  %235 = vst [vmem:[%s3 + $0x48] sm:$0xff] %v195
  %236 = vst [vmem:[%s3 + $0x50] sm:$0xff] %v196
  %237 = vst [vmem:[%s3 + $0x58] sm:$0xff] %v197
  %238 = vst [vmem:[%s3 + $0x60] sm:$0xff] %v198
  %239 = vst [vmem:[%s3 + $0x68] sm:$0xff] %v199
  %240 = vst [vmem:[%s3 + $0x70] sm:$0xff] %v200
  %241 = vst [vmem:[%s3 + $0x78] sm:$0xff] %v201
  %242 = vst [vmem:[%s3 + $0x80] sm:$0xff] %v202
  %243 = vst [vmem:[%s3 + $0x88] sm:$0xff] %v203
  %244 = vst [vmem:[%s3 + $0x90] sm:$0xff] %v204
  %vm245 = vcmask 556032
  %246 = vst.msk [vmem:[%s3 + $0x98] sm:$0xff] %vm245, %v205
  %247 = vst [vmem:[%s3 + $0xa0] sm:$0x3f] %v206
  %248 = vst [vmem:[%s3 + $0xa8] sm:$0x3f] %v207
  %249 = vst [vmem:[%s3 + $0xb0] sm:$0x3f] %v208
  %250 = vst [vmem:[%s3 + $0xb8] sm:$0x3f] %v209
  %251 = vst [vmem:[%s3 + $0xc0] sm:$0x3f] %v210
  %252 = vst [vmem:[%s3 + $0xc8] sm:$0x3f] %v211
  %253 = vst [vmem:[%s3 + $0xd0] sm:$0x3f] %v212
  %254 = vst [vmem:[%s3 + $0xd8] sm:$0x3f] %v213
  %255 = vst [vmem:[%s3 + $0xe0] sm:$0x3f] %v214
  %256 = vst [vmem:[%s3 + $0xe8] sm:$0x3f] %v215
  %257 = vst [vmem:[%s3 + $0xf0] sm:$0x3f] %v216
  %258 = vst [vmem:[%s3 + $0xf8] sm:$0x3f] %v217
  %259 = vst [vmem:[%s3 + $0x100] sm:$0x3f] %v218
  %260 = vst [vmem:[%s3 + $0x108] sm:$0x3f] %v219
  %261 = vst [vmem:[%s3 + $0x110] sm:$0x3f] %v220
  %262 = vst [vmem:[%s3 + $0x118] sm:$0x3f] %v221
  %263 = vst [vmem:[%s3 + $0x120] sm:$0x3f] %v222
  %264 = vst [vmem:[%s3 + $0x128] sm:$0x3f] %v223
  %265 = vst [vmem:[%s3 + $0x130] sm:$0x3f] %v224
  %vm266 = vcmask 553984
  %267 = vst.msk [vmem:[%s3 + $0x138] sm:$0x3f] %vm266, %v225
  // Predicated region
  $region14: #{model_forward.5} parent=0 // pred_check
    _
  $region15: #{model_forward.5} parent=0 // pred_check_branch
    %269 = sbr.rel (0) target = $region17
  $region16: #{model_forward.5} parent=0 // pred_region
    _
  $region17: #{model_forward.5} parent=0 // pred_fallthru
    _
  // Predicated region
  $region18: #{model_forward.5} parent=0 // pred_check
    _
  $region19: #{model_forward.5} parent=0 // pred_check_branch
    %271 = sbr.rel (0) target = $region21
  $region20: #{model_forward.5} parent=0 // pred_region
    _
  $region21: #{model_forward.5} parent=0 // pred_fallthru
    _

</llo_original>
